<compile_context>
chip_gen: v7x
topology: tpu7x:2x2x1
jax: 0.10.0
libtpu: 0.0.40
codegen_flags: <defaults>
</compile_context>

<pallas_src>
import math
import jax
import jax.numpy as jnp
from jax.experimental import pallas as pl
from jax.experimental.pallas import tpu as pltpu


def _round_up(n, m):
    return ((n + m - 1) // m) * m


def _pad2(a, rows, cols):
    return jnp.pad(a, ((0, rows - a.shape[0]), (0, cols - a.shape[1])))


# --------------------------------------------------------------------------
# Kernel body
# --------------------------------------------------------------------------
def _sigmoid_mlp_kernel(x_ref, w1_ref, b1_ref, w2_ref, b2_ref, w3_ref, b3_ref,
                        o_ref):
    # Layer 1: Linear (bf16 MXU operands, f32 accumulate) + bias + sigmoid.
    h1 = jnp.dot(x_ref[...], w1_ref[...], preferred_element_type=jnp.float32)
    h1 = jax.nn.sigmoid(h1 + b1_ref[...])          # (TB, H0p) + (1, H0p)
    h1 = h1.astype(w2_ref.dtype)                   # back to bf16 for the MXU

    # Layer 2: Linear + sigmoid.
    h2 = jnp.dot(h1, w2_ref[...], preferred_element_type=jnp.float32)
    h2 = jax.nn.sigmoid(h2 + b2_ref[...])
    h2 = h2.astype(w3_ref.dtype)

    # Layer 3: Linear (no activation).
    q = jnp.dot(h2, w3_ref[...], preferred_element_type=jnp.float32)
    o_ref[...] = (q + b3_ref[...]).astype(o_ref.dtype)


# --------------------------------------------------------------------------
# One-time parameter preparation (padding + bf16 cast hoisted out of forward)
# --------------------------------------------------------------------------
def prepare_params(params):
    """Pad feature dims to 128 and cast weights to bf16 exactly once.

    params: (w1, b1, w2, b2, w3, b3) with weights stored (in, out) and biases
            (1, out), float32. Keep the returned dict around across forward
            calls so the weights are never re-padded / re-cast per step.
    """
    w1, b1, w2, b2, w3, b3 = params
    D, H0 = w1.shape
    H1 = w2.shape[1]
    A = w3.shape[1]
    H0p, H1p, Ap = (_round_up(d, 128) for d in (H0, H1, A))

    # Zero padding keeps the math exact: padded hidden cols -> sigmoid(0)=0.5,
    # killed by the zero rows of the next weight matrix.
    return dict(
        w1=_pad2(w1, D, H0p).astype(jnp.bfloat16),     # contraction dim D unpadded
        b1=_pad2(b1, 1, H0p).astype(jnp.float32),
        w2=_pad2(w2, H0p, H1p).astype(jnp.bfloat16),
        b2=_pad2(b2, 1, H1p).astype(jnp.float32),
        w3=_pad2(w3, H1p, Ap).astype(jnp.bfloat16),
        b3=_pad2(b3, 1, Ap).astype(jnp.float32),
        dims=(D, H0, H1, A),
        padded=(H0p, H1p, Ap),
    )


# --------------------------------------------------------------------------
# pallas_call construction
# --------------------------------------------------------------------------
_CONST_IDX = lambda i: (0, 0)
_BATCH_IDX = lambda i: (i, 0)


def _const_spec(shape, single_buffered):
    """Constant-index BlockSpec for VMEM-resident weights/biases.

    Single-buffered when supported: the block index never changes across the
    grid, so the default second pipeline buffer is dead VMEM.
    """
    if single_buffered:
        try:
            return pl.BlockSpec(shape, _CONST_IDX, pipeline_mode=pl.Buffered(1))
        except (AttributeError, TypeError):
            pass
    return pl.BlockSpec(shape, _CONST_IDX)


def _choose_batch_tiling(B, batch_tile):
    """Balanced batch tiles; >= 2 grid steps when possible (v7x megacore)."""
    min_tiles = 2 if B > 16 else 1
    n_tiles = max(pl.cdiv(B, batch_tile), min_tiles)
    TB = _round_up(pl.cdiv(B, n_tiles), 16)        # bf16 sublane multiple
    Bp = n_tiles * TB
    return TB, Bp


def _build_call(TB, Bp, D, H0p, H1p, Ap, vmem_limit, cost, single_buf):
    return pl.pallas_call(
        _sigmoid_mlp_kernel,
        out_shape=jax.ShapeDtypeStruct((Bp, Ap), jnp.float32),
        grid=(Bp // TB,),
        in_specs=[
            pl.BlockSpec((TB, D), _BATCH_IDX),     # x: batch-tiled, streamed
            _const_spec((D, H0p), single_buf),     # weights/biases: resident
            _const_spec((1, H0p), single_buf),
            _const_spec((H0p, H1p), single_buf),
            _const_spec((1, H1p), single_buf),
            _const_spec((H1p, Ap), single_buf),
            _const_spec((1, Ap), single_buf),
        ],
        out_specs=pl.BlockSpec((TB, Ap), _BATCH_IDX),
        compiler_params=pltpu.CompilerParams(
            dimension_semantics=("parallel",),     # megacore sharding on v7x
            vmem_limit_bytes=vmem_limit,
        ),
        cost_estimate=cost,
    )


def sigmoid_mlp(x, prep, *, batch_tile=512):
    """3-layer sigmoid MLP forward as one batch-tiled Pallas kernel.

    x:    (B, state_size) float32
    prep: output of prepare_params() (pre-padded bf16 weights / f32 biases).
    """
    D, H0, H1, A = prep["dims"]
    H0p, H1p, Ap = prep["padded"]
    B = x.shape[0]
    assert x.shape[1] == D, f"expected state_size={D}, got {x.shape[1]}"

    TB, Bp = _choose_batch_tiling(B, batch_tile)
    xp = jnp.pad(x, ((0, Bp - B), (0, 0))).astype(jnp.bfloat16)

    # VMEM budget: single-buffered bf16 weights + f32 biases, double-buffered
    # x/out tiles, f32 intermediates; generation-aware cap with headroom.
    weight_bytes = 2 * (D * H0p + H0p * H1p + H1p * Ap) + 4 * (H0p + H1p + Ap)
    io_bytes = 2 * (TB * D * 2 + TB * Ap * 4)
    interm_bytes = TB * (H0p + H1p + Ap) * 4
    est = weight_bytes + io_bytes + interm_bytes
    try:
        cap = int(0.75 * pltpu.get_tpu_info().vmem_capacity_bytes)
    except Exception:
        cap = 48 << 20                             # safe on v7x (64 MiB / TC)
    vmem_limit = min(max(int(1.5 * est), 8 << 20), cap)

    cost = pl.CostEstimate(
        flops=2 * Bp * (D * H0p + H0p * H1p + H1p * Ap),
        transcendentals=Bp * (H0p + H1p),
        bytes_accessed=(xp.size * 2
                        + 2 * (D * H0p + H0p * H1p + H1p * Ap)
                        + 4 * (H0p + H1p + Ap)
                        + Bp * Ap * 4),
    )

    args = (xp, prep["w1"], prep["b1"], prep["w2"], prep["b2"],
            prep["w3"], prep["b3"])
    try:
        out = _build_call(TB, Bp, D, H0p, H1p, Ap, vmem_limit, cost, True)(*args)
    except Exception:
        # Fallback if this JAX build rejects single-buffered constant inputs;
        # identical semantics, just one extra (double) weight buffer.
        out = _build_call(TB, Bp, D, H0p, H1p, Ap, vmem_limit, cost, False)(*args)

    return out[:B, :A]


# --------------------------------------------------------------------------
# Reference + init helpers
# --------------------------------------------------------------------------
def init_params(key, state_size, action_size, hidden=(128, 64)):
    """nn.Linear-style init: U(-1/sqrt(fan_in), 1/sqrt(fan_in)).

    Weights stored transposed as (in_features, out_features); biases (1, out).
    """
    h0, h1 = hidden
    dims = [(state_size, h0), (h0, h1), (h1, action_size)]
    params = []
    keys = jax.random.split(key, 2 * len(dims))
    for i, (fin, fout) in enumerate(dims):
        bound = 1.0 / math.sqrt(fin)
        w = jax.random.uniform(keys[2 * i], (fin, fout), jnp.float32,
                               minval=-bound, maxval=bound)
        b = jax.random.uniform(keys[2 * i + 1], (1, fout), jnp.float32,
                               minval=-bound, maxval=bound)
        params += [w, b]
    return tuple(params)


def sigmoid_mlp_ref(x, params):
    """Pure-JAX f32 reference for correctness checking."""
    w1, b1, w2, b2, w3, b3 = params
    h = jax.nn.sigmoid(x @ w1 + b1)
    h = jax.nn.sigmoid(h @ w2 + b2)
    return h @ w3 + b3


if __name__ == "__main__":
    key = jax.random.PRNGKey(0)
    k_x, k_p = jax.random.split(key)

    batch = 300                       # exercises the balanced multi-tile grid
    state_size = 32
    action_size = 16
    hidden = (128, 64)                # small stand-in for the default (1500, 500)

    x = jax.random.normal(k_x, (batch, state_size), jnp.float32)
    params = init_params(k_p, state_size, action_size, hidden)
    prep = prepare_params(params)     # pad + bf16-cast once, reused every call

    out = jax.block_until_ready(sigmoid_mlp(x, prep))
    ref = sigmoid_mlp_ref(x, params)

    assert out.shape == (batch, action_size)
    # bf16 MXU operands with f32 accumulation -> loosened tolerance vs f32 ref.
    err = jnp.max(jnp.abs(out - ref))
    assert jnp.allclose(out, ref, atol=5e-2, rtol=5e-2), (
        f"mismatch vs reference, max abs err {err}")

    print("KERNEL_OK")
</pallas_src>

<mosaic_0001>
module attributes {stable_mosaic.version = 11 : i64} {
  func.func @_sigmoid_mlp_kernel(%arg0: i32, %arg1: memref<160x32xbf16, #tpu.memory_space<vmem>>, %arg2: memref<32x128xbf16, #tpu.memory_space<vmem>>, %arg3: memref<1x128xf32, #tpu.memory_space<vmem>>, %arg4: memref<128x128xbf16, #tpu.memory_space<vmem>>, %arg5: memref<1x128xf32, #tpu.memory_space<vmem>>, %arg6: memref<128x128xbf16, #tpu.memory_space<vmem>>, %arg7: memref<1x128xf32, #tpu.memory_space<vmem>>, %arg8: memref<160x128xf32, #tpu.memory_space<vmem>>) attributes {dimension_semantics = [#tpu.dimension_semantics<parallel>], iteration_bounds = array<i64: 2>, scalar_prefetch = 0 : i64, scratch_operands = 0 : i64, tpu.core_type = #tpu.core_type<tc>, window_params = [{transform_indices = @transform_0, window_bounds = array<i64: 160, 32>}, {pipeline_mode = #tpu.pipeline_mode<synchronous>, transform_indices = @transform_1, window_bounds = array<i64: 32, 128>}, {pipeline_mode = #tpu.pipeline_mode<synchronous>, transform_indices = @transform_2, window_bounds = array<i64: 1, 128>}, {pipeline_mode = #tpu.pipeline_mode<synchronous>, transform_indices = @transform_3, window_bounds = array<i64: 128, 128>}, {pipeline_mode = #tpu.pipeline_mode<synchronous>, transform_indices = @transform_4, window_bounds = array<i64: 1, 128>}, {pipeline_mode = #tpu.pipeline_mode<synchronous>, transform_indices = @transform_5, window_bounds = array<i64: 128, 128>}, {pipeline_mode = #tpu.pipeline_mode<synchronous>, transform_indices = @transform_6, window_bounds = array<i64: 1, 128>}, {transform_indices = @transform_7, window_bounds = array<i64: 160, 128>}]} {
    %c0 = arith.constant 0 : index
    %c0_0 = arith.constant 0 : index
    %0 = vector.load %arg1[%c0, %c0_0] : memref<160x32xbf16, #tpu.memory_space<vmem>>, vector<160x32xbf16>
    %c0_1 = arith.constant 0 : index
    %c0_2 = arith.constant 0 : index
    %1 = vector.load %arg2[%c0_1, %c0_2] : memref<32x128xbf16, #tpu.memory_space<vmem>>, vector<32x128xbf16>
    %cst = arith.constant dense<0.000000e+00> : vector<160x128xf32>
    %2 = tpu.matmul %0, %1, %cst {dimension_numbers = #tpu.dot_dimension_numbers<[1], [0], [0], [1], [0, 0, 1, 1], [], []>} : vector<160x32xbf16>, vector<32x128xbf16>, vector<160x128xf32> -> vector<160x128xf32>
    %c0_3 = arith.constant 0 : index
    %c0_4 = arith.constant 0 : index
    %3 = vector.load %arg3[%c0_3, %c0_4] : memref<1x128xf32, #tpu.memory_space<vmem>>, vector<1x128xf32>
    %4 = vector.broadcast %3 : vector<1x128xf32> to vector<160x128xf32>
    %5 = arith.addf %2, %4 : vector<160x128xf32>
    %6 = arith.negf %5 : vector<160x128xf32>
    %7 = math.exp %6 : vector<160x128xf32>
    %cst_5 = arith.constant 1.000000e+00 : f32
    %8 = vector.broadcast %cst_5 : f32 to vector<160x128xf32>
    %9 = arith.addf %8, %7 : vector<160x128xf32>
    %10 = arith.divf %8, %9 : vector<160x128xf32>
    %11 = arith.truncf %10 : vector<160x128xf32> to vector<160x128xbf16>
    %c0_6 = arith.constant 0 : index
    %c0_7 = arith.constant 0 : index
    %12 = vector.load %arg4[%c0_6, %c0_7] : memref<128x128xbf16, #tpu.memory_space<vmem>>, vector<128x128xbf16>
    %cst_8 = arith.constant dense<0.000000e+00> : vector<160x128xf32>
    %13 = tpu.matmul %11, %12, %cst_8 {dimension_numbers = #tpu.dot_dimension_numbers<[1], [0], [0], [1], [0, 0, 1, 1], [], []>} : vector<160x128xbf16>, vector<128x128xbf16>, vector<160x128xf32> -> vector<160x128xf32>
    %c0_9 = arith.constant 0 : index
    %c0_10 = arith.constant 0 : index
    %14 = vector.load %arg5[%c0_9, %c0_10] : memref<1x128xf32, #tpu.memory_space<vmem>>, vector<1x128xf32>
    %15 = vector.broadcast %14 : vector<1x128xf32> to vector<160x128xf32>
    %16 = arith.addf %13, %15 : vector<160x128xf32>
    %17 = arith.negf %16 : vector<160x128xf32>
    %18 = math.exp %17 : vector<160x128xf32>
    %cst_11 = arith.constant 1.000000e+00 : f32
    %19 = vector.broadcast %cst_11 : f32 to vector<160x128xf32>
    %20 = arith.addf %19, %18 : vector<160x128xf32>
    %21 = arith.divf %19, %20 : vector<160x128xf32>
    %22 = arith.truncf %21 : vector<160x128xf32> to vector<160x128xbf16>
    %c0_12 = arith.constant 0 : index
    %c0_13 = arith.constant 0 : index
    %23 = vector.load %arg6[%c0_12, %c0_13] : memref<128x128xbf16, #tpu.memory_space<vmem>>, vector<128x128xbf16>
    %cst_14 = arith.constant dense<0.000000e+00> : vector<160x128xf32>
    %24 = tpu.matmul %22, %23, %cst_14 {dimension_numbers = #tpu.dot_dimension_numbers<[1], [0], [0], [1], [0, 0, 1, 1], [], []>} : vector<160x128xbf16>, vector<128x128xbf16>, vector<160x128xf32> -> vector<160x128xf32>
    %c0_15 = arith.constant 0 : index
    %c0_16 = arith.constant 0 : index
    %25 = vector.load %arg7[%c0_15, %c0_16] : memref<1x128xf32, #tpu.memory_space<vmem>>, vector<1x128xf32>
    %26 = vector.broadcast %25 : vector<1x128xf32> to vector<160x128xf32>
    %27 = arith.addf %24, %26 : vector<160x128xf32>
    %c0_17 = arith.constant 0 : index
    %c0_18 = arith.constant 0 : index
    %28 = vector.load %arg8[%c0_17, %c0_18] : memref<160x128xf32, #tpu.memory_space<vmem>>, vector<160x128xf32>
    tpu.vector_store %arg8[%c0_17, %c0_18], %27 {strides = array<i32>} : memref<160x128xf32, #tpu.memory_space<vmem>>, vector<160x128xf32>,
    return
  }
  func.func @transform_0(%arg0: i32) -> (i32, i32) {
    %c0_i32 = arith.constant 0 : i32
    %c0_i32_0 = arith.constant 0 : i32
    return %arg0, %c0_i32 : i32, i32
  }
  func.func @transform_1(%arg0: i32) -> (i32, i32) {
    %c0_i32 = arith.constant 0 : i32
    %c0_i32_0 = arith.constant 0 : i32
    %c0_i32_1 = arith.constant 0 : i32
    return %c0_i32, %c0_i32_0 : i32, i32
  }
  func.func @transform_2(%arg0: i32) -> (i32, i32) {
    %c0_i32 = arith.constant 0 : i32
    %c0_i32_0 = arith.constant 0 : i32
    %c0_i32_1 = arith.constant 0 : i32
    return %c0_i32, %c0_i32_0 : i32, i32
  }
  func.func @transform_3(%arg0: i32) -> (i32, i32) {
    %c0_i32 = arith.constant 0 : i32
    %c0_i32_0 = arith.constant 0 : i32
    %c0_i32_1 = arith.constant 0 : i32
    return %c0_i32, %c0_i32_0 : i32, i32
  }
  func.func @transform_4(%arg0: i32) -> (i32, i32) {
    %c0_i32 = arith.constant 0 : i32
    %c0_i32_0 = arith.constant 0 : i32
    %c0_i32_1 = arith.constant 0 : i32
    return %c0_i32, %c0_i32_0 : i32, i32
  }
  func.func @transform_5(%arg0: i32) -> (i32, i32) {
    %c0_i32 = arith.constant 0 : i32
    %c0_i32_0 = arith.constant 0 : i32
    %c0_i32_1 = arith.constant 0 : i32
    return %c0_i32, %c0_i32_0 : i32, i32
  }
  func.func @transform_6(%arg0: i32) -> (i32, i32) {
    %c0_i32 = arith.constant 0 : i32
    %c0_i32_0 = arith.constant 0 : i32
    %c0_i32_1 = arith.constant 0 : i32
    return %c0_i32, %c0_i32_0 : i32, i32
  }
  func.func @transform_7(%arg0: i32) -> (i32, i32) {
    %c0_i32 = arith.constant 0 : i32
    %c0_i32_0 = arith.constant 0 : i32
    return %arg0, %c0_i32 : i32, i32
  }
}

module attributes {stable_mosaic.version = 11 : i64} {
  func.func @_sigmoid_mlp_kernel(%arg0: i32, %arg1: memref<160x32xbf16, #tpu.memory_space<vmem>>, %arg2: memref<32x128xbf16, #tpu.memory_space<vmem>>, %arg3: memref<1x128xf32, #tpu.memory_space<vmem>>, %arg4: memref<128x128xbf16, #tpu.memory_space<vmem>>, %arg5: memref<1x128xf32, #tpu.memory_space<vmem>>, %arg6: memref<128x128xbf16, #tpu.memory_space<vmem>>, %arg7: memref<1x128xf32, #tpu.memory_space<vmem>>, %arg8: memref<160x128xf32, #tpu.memory_space<vmem>>) attributes {dimension_semantics = [#tpu.dimension_semantics<parallel>], iteration_bounds = array<i64: 2>, scalar_prefetch = 0 : i64, scratch_operands = 0 : i64, tpu.core_type = #tpu.core_type<tc>, window_params = [{transform_indices = @transform_0, window_bounds = array<i64: 160, 32>}, {pipeline_mode = #tpu.pipeline_mode<synchronous>, transform_indices = @transform_1, window_bounds = array<i64: 32, 128>}, {pipeline_mode = #tpu.pipeline_mode<synchronous>, transform_indices = @transform_2, window_bounds = array<i64: 1, 128>}, {pipeline_mode = #tpu.pipeline_mode<synchronous>, transform_indices = @transform_3, window_bounds = array<i64: 128, 128>}, {pipeline_mode = #tpu.pipeline_mode<synchronous>, transform_indices = @transform_4, window_bounds = array<i64: 1, 128>}, {pipeline_mode = #tpu.pipeline_mode<synchronous>, transform_indices = @transform_5, window_bounds = array<i64: 128, 128>}, {pipeline_mode = #tpu.pipeline_mode<synchronous>, transform_indices = @transform_6, window_bounds = array<i64: 1, 128>}, {transform_indices = @transform_7, window_bounds = array<i64: 160, 128>}]} {
    %c0 = arith.constant 0 : index
    %c0_0 = arith.constant 0 : index
    %0 = vector.load %arg1[%c0, %c0_0] : memref<160x32xbf16, #tpu.memory_space<vmem>>, vector<160x32xbf16>
    %c0_1 = arith.constant 0 : index
    %c0_2 = arith.constant 0 : index
    %1 = vector.load %arg2[%c0_1, %c0_2] : memref<32x128xbf16, #tpu.memory_space<vmem>>, vector<32x128xbf16>
    %cst = arith.constant dense<0.000000e+00> : vector<160x128xf32>
    %2 = tpu.matmul %0, %1, %cst {dimension_numbers = #tpu.dot_dimension_numbers<[1], [0], [0], [1], [0, 0, 1, 1], [], []>} : vector<160x32xbf16>, vector<32x128xbf16>, vector<160x128xf32> -> vector<160x128xf32>
    %c0_3 = arith.constant 0 : index
    %c0_4 = arith.constant 0 : index
    %3 = vector.load %arg3[%c0_3, %c0_4] : memref<1x128xf32, #tpu.memory_space<vmem>>, vector<1x128xf32>
    %4 = vector.broadcast %3 : vector<1x128xf32> to vector<160x128xf32>
    %5 = arith.addf %2, %4 : vector<160x128xf32>
    %6 = arith.negf %5 : vector<160x128xf32>
    %7 = math.exp %6 : vector<160x128xf32>
    %cst_5 = arith.constant 1.000000e+00 : f32
    %8 = vector.broadcast %cst_5 : f32 to vector<160x128xf32>
    %9 = arith.addf %8, %7 : vector<160x128xf32>
    %10 = arith.divf %8, %9 : vector<160x128xf32>
    %11 = arith.truncf %10 : vector<160x128xf32> to vector<160x128xbf16>
    %c0_6 = arith.constant 0 : index
    %c0_7 = arith.constant 0 : index
    %12 = vector.load %arg4[%c0_6, %c0_7] : memref<128x128xbf16, #tpu.memory_space<vmem>>, vector<128x128xbf16>
    %cst_8 = arith.constant dense<0.000000e+00> : vector<160x128xf32>
    %13 = tpu.matmul %11, %12, %cst_8 {dimension_numbers = #tpu.dot_dimension_numbers<[1], [0], [0], [1], [0, 0, 1, 1], [], []>} : vector<160x128xbf16>, vector<128x128xbf16>, vector<160x128xf32> -> vector<160x128xf32>
    %c0_9 = arith.constant 0 : index
    %c0_10 = arith.constant 0 : index
    %14 = vector.load %arg5[%c0_9, %c0_10] : memref<1x128xf32, #tpu.memory_space<vmem>>, vector<1x128xf32>
    %15 = vector.broadcast %14 : vector<1x128xf32> to vector<160x128xf32>
    %16 = arith.addf %13, %15 : vector<160x128xf32>
    %17 = arith.negf %16 : vector<160x128xf32>
    %18 = math.exp %17 : vector<160x128xf32>
    %cst_11 = arith.constant 1.000000e+00 : f32
    %19 = vector.broadcast %cst_11 : f32 to vector<160x128xf32>
    %20 = arith.addf %19, %18 : vector<160x128xf32>
    %21 = arith.divf %19, %20 : vector<160x128xf32>
    %22 = arith.truncf %21 : vector<160x128xf32> to vector<160x128xbf16>
    %c0_12 = arith.constant 0 : index
    %c0_13 = arith.constant 0 : index
    %23 = vector.load %arg6[%c0_12, %c0_13] : memref<128x128xbf16, #tpu.memory_space<vmem>>, vector<128x128xbf16>
    %cst_14 = arith.constant dense<0.000000e+00> : vector<160x128xf32>
    %24 = tpu.matmul %22, %23, %cst_14 {dimension_numbers = #tpu.dot_dimension_numbers<[1], [0], [0], [1], [0, 0, 1, 1], [], []>} : vector<160x128xbf16>, vector<128x128xbf16>, vector<160x128xf32> -> vector<160x128xf32>
    %c0_15 = arith.constant 0 : index
    %c0_16 = arith.constant 0 : index
    %25 = vector.load %arg7[%c0_15, %c0_16] : memref<1x128xf32, #tpu.memory_space<vmem>>, vector<1x128xf32>
    %26 = vector.broadcast %25 : vector<1x128xf32> to vector<160x128xf32>
    %27 = arith.addf %24, %26 : vector<160x128xf32>
    %c0_17 = arith.constant 0 : index
    %c0_18 = arith.constant 0 : index
    %28 = vector.load %arg8[%c0_17, %c0_18] : memref<160x128xf32, #tpu.memory_space<vmem>>, vector<160x128xf32>
    tpu.vector_store %arg8[%c0_17, %c0_18], %27 {strides = array<i32>} : memref<160x128xf32, #tpu.memory_space<vmem>>, vector<160x128xf32>,
    return
  }
  func.func @transform_0(%arg0: i32) -> (i32, i32) {
    %c0_i32 = arith.constant 0 : i32
    %c0_i32_0 = arith.constant 0 : i32
    return %arg0, %c0_i32 : i32, i32
  }
  func.func @transform_1(%arg0: i32) -> (i32, i32) {
    %c0_i32 = arith.constant 0 : i32
    %c0_i32_0 = arith.constant 0 : i32
    %c0_i32_1 = arith.constant 0 : i32
    return %c0_i32, %c0_i32_0 : i32, i32
  }
  func.func @transform_2(%arg0: i32) -> (i32, i32) {
    %c0_i32 = arith.constant 0 : i32
    %c0_i32_0 = arith.constant 0 : i32
    %c0_i32_1 = arith.constant 0 : i32
    return %c0_i32, %c0_i32_0 : i32, i32
  }
  func.func @transform_3(%arg0: i32) -> (i32, i32) {
    %c0_i32 = arith.constant 0 : i32
    %c0_i32_0 = arith.constant 0 : i32
    %c0_i32_1 = arith.constant 0 : i32
    return %c0_i32, %c0_i32_0 : i32, i32
  }
  func.func @transform_4(%arg0: i32) -> (i32, i32) {
    %c0_i32 = arith.constant 0 : i32
    %c0_i32_0 = arith.constant 0 : i32
    %c0_i32_1 = arith.constant 0 : i32
    return %c0_i32, %c0_i32_0 : i32, i32
  }
  func.func @transform_5(%arg0: i32) -> (i32, i32) {
    %c0_i32 = arith.constant 0 : i32
    %c0_i32_0 = arith.constant 0 : i32
    %c0_i32_1 = arith.constant 0 : i32
    return %c0_i32, %c0_i32_0 : i32, i32
  }
  func.func @transform_6(%arg0: i32) -> (i32, i32) {
    %c0_i32 = arith.constant 0 : i32
    %c0_i32_0 = arith.constant 0 : i32
    %c0_i32_1 = arith.constant 0 : i32
    return %c0_i32, %c0_i32_0 : i32, i32
  }
  func.func @transform_7(%arg0: i32) -> (i32, i32) {
    %c0_i32 = arith.constant 0 : i32
    %c0_i32_0 = arith.constant 0 : i32
    return %arg0, %c0_i32 : i32, i32
  }
}

</mosaic_0001>

<llo_original>
// kernel: tpu_custom_call.1
$region0: #{tpu_custom_call.1}
  #allocation0 [shape = 'u32[]', space=smem, size = 0x4, offset = 0x4, fixed_abs, tag = 'smem constant byte address 0x4 - core index']
  #allocation1 [shape = 'u32[144,128]{1,0:T(1,128)}', space=vmem, size = 0x12000, scoped, tag = 'internal scratch']
  %s0 = inlined_call_operand.vmem [shape: bf16[320,32], index: 0, kind: input, shape index: {}]
  %s1 = inlined_call_operand.vmem [shape: bf16[32,128], index: 1, kind: input, shape index: {}]
  %s2 = inlined_call_operand.vmem [shape: f32[1,128], index: 2, kind: input, shape index: {}]
  %s3 = inlined_call_operand.vmem [shape: bf16[128,128], index: 3, kind: input, shape index: {}]
  %s4 = inlined_call_operand.vmem [shape: f32[1,128], index: 4, kind: input, shape index: {}]
  %s5 = inlined_call_operand.vmem [shape: bf16[128,128], index: 5, kind: input, shape index: {}]
  %s6 = inlined_call_operand.vmem [shape: f32[1,128], index: 6, kind: input, shape index: {}]
  %s7 = inlined_call_operand.hbm [shape: f32[320,128], index: 7, kind: output, shape index: {}]
  %s8 = sld [smem:[#allocation0]]
  $region61: #{tpu_custom_call.1} parent=0
    _
  %s10 = ssub.s32 1, %s8
  %s11 = scalar_select 0, %s10, %s8
  $region1: #{tpu_custom_call.1} parent=0
    #allocation2 [shape = 'u8[163840]{0}', space=vmem, size = 0x28000, scoped, tag = 'output window, operand 0']
    #allocation3 [shape = 's32[2]{0}', space=sflag, size = 0x8, scoped, tag = 'scoped memory for tpu_custom_call.1']
    %12 = vsyncpa [#allocation3], 0
    %s13 = scalar_lea.sflag [#allocation3], 1
    %14 = vsyncpa %s13, 0
    loop: start=0, step=1, limit=4
    $region2: #{tpu_custom_call.1} parent=1 // loop_pre_header
      _
    $region3: #{tpu_custom_call.1} parent=1 // loop_header
      %s16 = sphi 0, %s20
      %p17 = scmp.ge.s32.totalorder %s16, 4
      %s26 = sphi 0, %s28
      %s29 = sphi 0, %s26
      %s30 = sphi 0, %s29
      %s46 = sphi 0, %s30
      %s50 = sphi 0, %s50
      %s52 = sphi 0, %s50
      %s53 = sphi 0, %s52
      %s67 = sphi 0, %s53
      %s71 = sphi 0, %s71
      %s73 = sphi 0, %s71
      %s74 = sphi 0, %s73
      %s88 = sphi 0, %s74
      %s92 = sphi 0, %s92
      %s94 = sphi 0, %s92
      %s95 = sphi 0, %s94
      %s109 = sphi 0, %s95
      %s113 = sphi 0, %s113
      %s115 = sphi 0, %s113
      %s116 = sphi 0, %s115
      %s130 = sphi 0, %s116
      %s134 = sphi 0, %s134
      %s136 = sphi 0, %s134
      %s137 = sphi 0, %s136
      %s151 = sphi 0, %s137
      %s155 = sphi 0, %s155
      %s157 = sphi 0, %s155
      %s158 = sphi 0, %s157
      %s172 = sphi 0, %s158
      %s178 = sphi 0, %s180
      %s181 = sphi 0, %s178
      %s182 = sphi 0, %s181
      %s198 = sphi 0, %s182
    $region4: #{tpu_custom_call.1} parent=1 // loop_header_branch
      %19 = sbr.rel (%p17) target = $region8
    $region5: #{tpu_custom_call.1} parent=1 // loop_body
      %s21 = ssub.s32 %s16, 1
      %s22 = ssub.s32 %s16, 2
      %s23 = sadd.s32 %s16, 1
      %s24 = ssub.s32 %s16, %s23
      %p25 = scmp.eq.s32.totalorder %s24, 0
      %s27 = sadd.s32 %s26, 1
      %s28 = scalar_select %p25, %s26, %s27
      %p31 = pneg %p25
      %p32 = scmp.eq.s32.totalorder %s16, 1
      %p33 = por %p31, %p32
      %p34 = scmp.ne.s32.totalorder %s26, %s29
      %p35 = scmp.eq.s32.totalorder %s16, 0
      %p36 = por %p34, %p35
      %p37 = scmp.ne.s32.totalorder %s26, %s29
      %p38 = scmp.eq.s32.totalorder %s21, 1
      %p39 = por %p37, %p38
      %p40 = scmp.ne.s32.totalorder %s29, %s30
      %p41 = scmp.eq.s32.totalorder %s21, 0
      %p42 = por %p40, %p41
      %p43 = scmp.ne.s32.totalorder %s29, %s30
      %p44 = scmp.eq.s32.totalorder %s22, 1
      %p45 = por %p43, %p44
      %p47 = scmp.ne.s32.totalorder %s30, %s46
      %p48 = scmp.eq.s32.totalorder %s22, 0
      %p49 = por %p47, %p48
      %s51 = sadd.s32 %s50, 1
      %p54 = scmp.eq.s32.totalorder %s16, 1
      %p55 = scmp.ne.s32.totalorder %s50, %s52
      %p56 = scmp.eq.s32.totalorder %s16, 0
      %p57 = por %p55, %p56
      %p58 = scmp.ne.s32.totalorder %s50, %s52
      %p59 = scmp.eq.s32.totalorder %s21, 1
      %p60 = por %p58, %p59
      %p61 = scmp.ne.s32.totalorder %s52, %s53
      %p62 = scmp.eq.s32.totalorder %s21, 0
      %p63 = por %p61, %p62
      %p64 = scmp.ne.s32.totalorder %s52, %s53
      %p65 = scmp.eq.s32.totalorder %s22, 1
      %p66 = por %p64, %p65
      %p68 = scmp.ne.s32.totalorder %s53, %s67
      %p69 = scmp.eq.s32.totalorder %s22, 0
      %p70 = por %p68, %p69
      %s72 = sadd.s32 %s71, 1
      %p75 = scmp.eq.s32.totalorder %s16, 1
      %p76 = scmp.ne.s32.totalorder %s71, %s73
      %p77 = scmp.eq.s32.totalorder %s16, 0
      %p78 = por %p76, %p77
      %p79 = scmp.ne.s32.totalorder %s71, %s73
      %p80 = scmp.eq.s32.totalorder %s21, 1
      %p81 = por %p79, %p80
      %p82 = scmp.ne.s32.totalorder %s73, %s74
      %p83 = scmp.eq.s32.totalorder %s21, 0
      %p84 = por %p82, %p83
      %p85 = scmp.ne.s32.totalorder %s73, %s74
      %p86 = scmp.eq.s32.totalorder %s22, 1
      %p87 = por %p85, %p86
      %p89 = scmp.ne.s32.totalorder %s74, %s88
      %p90 = scmp.eq.s32.totalorder %s22, 0
      %p91 = por %p89, %p90
      %s93 = sadd.s32 %s92, 1
      %p96 = scmp.eq.s32.totalorder %s16, 1
      %p97 = scmp.ne.s32.totalorder %s92, %s94
      %p98 = scmp.eq.s32.totalorder %s16, 0
      %p99 = por %p97, %p98
      %p100 = scmp.ne.s32.totalorder %s92, %s94
      %p101 = scmp.eq.s32.totalorder %s21, 1
      %p102 = por %p100, %p101
      %p103 = scmp.ne.s32.totalorder %s94, %s95
      %p104 = scmp.eq.s32.totalorder %s21, 0
      %p105 = por %p103, %p104
      %p106 = scmp.ne.s32.totalorder %s94, %s95
      %p107 = scmp.eq.s32.totalorder %s22, 1
      %p108 = por %p106, %p107
      %p110 = scmp.ne.s32.totalorder %s95, %s109
      %p111 = scmp.eq.s32.totalorder %s22, 0
      %p112 = por %p110, %p111
      %s114 = sadd.s32 %s113, 1
      %p117 = scmp.eq.s32.totalorder %s16, 1
      %p118 = scmp.ne.s32.totalorder %s113, %s115
      %p119 = scmp.eq.s32.totalorder %s16, 0
      %p120 = por %p118, %p119
      %p121 = scmp.ne.s32.totalorder %s113, %s115
      %p122 = scmp.eq.s32.totalorder %s21, 1
      %p123 = por %p121, %p122
      %p124 = scmp.ne.s32.totalorder %s115, %s116
      %p125 = scmp.eq.s32.totalorder %s21, 0
      %p126 = por %p124, %p125
      %p127 = scmp.ne.s32.totalorder %s115, %s116
      %p128 = scmp.eq.s32.totalorder %s22, 1
      %p129 = por %p127, %p128
      %p131 = scmp.ne.s32.totalorder %s116, %s130
      %p132 = scmp.eq.s32.totalorder %s22, 0
      %p133 = por %p131, %p132
      %s135 = sadd.s32 %s134, 1
      %p138 = scmp.eq.s32.totalorder %s16, 1
      %p139 = scmp.ne.s32.totalorder %s134, %s136
      %p140 = scmp.eq.s32.totalorder %s16, 0
      %p141 = por %p139, %p140
      %p142 = scmp.ne.s32.totalorder %s134, %s136
      %p143 = scmp.eq.s32.totalorder %s21, 1
      %p144 = por %p142, %p143
      %p145 = scmp.ne.s32.totalorder %s136, %s137
      %p146 = scmp.eq.s32.totalorder %s21, 0
      %p147 = por %p145, %p146
      %p148 = scmp.ne.s32.totalorder %s136, %s137
      %p149 = scmp.eq.s32.totalorder %s22, 1
      %p150 = por %p148, %p149
      %p152 = scmp.ne.s32.totalorder %s137, %s151
      %p153 = scmp.eq.s32.totalorder %s22, 0
      %p154 = por %p152, %p153
      %s156 = sadd.s32 %s155, 1
      %p159 = scmp.eq.s32.totalorder %s16, 1
      %p160 = scmp.ne.s32.totalorder %s155, %s157
      %p161 = scmp.eq.s32.totalorder %s16, 0
      %p162 = por %p160, %p161
      %p163 = scmp.ne.s32.totalorder %s155, %s157
      %p164 = scmp.eq.s32.totalorder %s21, 1
      %p165 = por %p163, %p164
      %p166 = scmp.ne.s32.totalorder %s157, %s158
      %p167 = scmp.eq.s32.totalorder %s21, 0
      %p168 = por %p166, %p167
      %p169 = scmp.ne.s32.totalorder %s157, %s158
      %p170 = scmp.eq.s32.totalorder %s22, 1
      %p171 = por %p169, %p170
      %p173 = scmp.ne.s32.totalorder %s158, %s172
      %p174 = scmp.eq.s32.totalorder %s22, 0
      %p175 = por %p173, %p174
      %s176 = ssub.s32 %s16, %s23
      %p177 = scmp.eq.s32.totalorder %s176, 0
      %s179 = sadd.s32 %s178, 1
      %s180 = scalar_select %p177, %s178, %s179
      %p183 = pneg %p177
      %p184 = scmp.eq.s32.totalorder %s16, 1
      %p185 = por %p183, %p184
      %p186 = scmp.ne.s32.totalorder %s178, %s181
      %p187 = scmp.eq.s32.totalorder %s16, 0
      %p188 = por %p186, %p187
      %p189 = scmp.ne.s32.totalorder %s178, %s181
      %p190 = scmp.eq.s32.totalorder %s21, 1
      %p191 = por %p189, %p190
      %p192 = scmp.ne.s32.totalorder %s181, %s182
      %p193 = scmp.eq.s32.totalorder %s21, 0
      %p194 = por %p192, %p193
      %p195 = scmp.ne.s32.totalorder %s181, %s182
      %p196 = scmp.eq.s32.totalorder %s22, 1
      %p197 = por %p195, %p196
      %p199 = scmp.ne.s32.totalorder %s182, %s198
      %p200 = scmp.eq.s32.totalorder %s22, 0
      %p201 = por %p199, %p200
      %p202 = scmp.le.s32.totalorder 1, %s16
      %p203 = scmp.lt.s32.totalorder %s16, 3
      %p204 = pnand %p202, %p203
      %p205 = pneg %p204
      // Predicated region
      $region9: #{tpu_custom_call.1} parent=5 // pred_check
        _
      $region10: #{tpu_custom_call.1} parent=5 // pred_check_branch
        %207 = sbr.rel (%p204) target = $region12
      $region11: #{tpu_custom_call.1} parent=5 // pred_region
        %s208 = ssub.s32 %s16, 1
        // Predicated region
        $region13: #{tpu_custom_call.1} parent=11 // pred_check
          %p209 = pneg %p63
        $region14: #{tpu_custom_call.1} parent=11 // pred_check_branch
          %211 = sbr.rel (%p209) target = $region16
        $region15: #{tpu_custom_call.1} parent=11 // pred_region
          _
        $region16: #{tpu_custom_call.1} parent=11 // pred_fallthru
          _
        // Predicated region
        $region17: #{tpu_custom_call.1} parent=11 // pred_check
          %p212 = pneg %p84
        $region18: #{tpu_custom_call.1} parent=11 // pred_check_branch
          %214 = sbr.rel (%p212) target = $region20
        $region19: #{tpu_custom_call.1} parent=11 // pred_region
          _
        $region20: #{tpu_custom_call.1} parent=11 // pred_fallthru
          _
        // Predicated region
        $region21: #{tpu_custom_call.1} parent=11 // pred_check
          %p215 = pneg %p105
        $region22: #{tpu_custom_call.1} parent=11 // pred_check_branch
          %217 = sbr.rel (%p215) target = $region24
        $region23: #{tpu_custom_call.1} parent=11 // pred_region
          _
        $region24: #{tpu_custom_call.1} parent=11 // pred_fallthru
          _
        // Predicated region
        $region25: #{tpu_custom_call.1} parent=11 // pred_check
          %p218 = pneg %p126
        $region26: #{tpu_custom_call.1} parent=11 // pred_check_branch
          %220 = sbr.rel (%p218) target = $region28
        $region27: #{tpu_custom_call.1} parent=11 // pred_region
          _
        $region28: #{tpu_custom_call.1} parent=11 // pred_fallthru
          _
        // Predicated region
        $region29: #{tpu_custom_call.1} parent=11 // pred_check
          %p221 = pneg %p147
        $region30: #{tpu_custom_call.1} parent=11 // pred_check_branch
          %223 = sbr.rel (%p221) target = $region32
        $region31: #{tpu_custom_call.1} parent=11 // pred_region
          _
        $region32: #{tpu_custom_call.1} parent=11 // pred_fallthru
          _
        // Predicated region
        $region33: #{tpu_custom_call.1} parent=11 // pred_check
          %p224 = pneg %p168
        $region34: #{tpu_custom_call.1} parent=11 // pred_check_branch
          %226 = sbr.rel (%p224) target = $region36
        $region35: #{tpu_custom_call.1} parent=11 // pred_region
          _
        $region36: #{tpu_custom_call.1} parent=11 // pred_fallthru
          _
      $region12: #{tpu_custom_call.1} parent=5 // pred_fallthru
        _
      %p227 = scmp.lt.s32.totalorder %s16, 2
      // Predicated region
      $region37: #{tpu_custom_call.1} parent=5 // pred_check
        %p228 = pneg %p227
      $region38: #{tpu_custom_call.1} parent=5 // pred_check_branch
        %230 = sbr.rel (%p228) target = $region40
      $region39: #{tpu_custom_call.1} parent=5 // pred_region
        // Predicated region
        $region41: #{tpu_custom_call.1} parent=39 // pred_check
          %p231 = pneg %p36
        $region42: #{tpu_custom_call.1} parent=39 // pred_check_branch
          %233 = sbr.rel (%p231) target = $region44
        $region43: #{tpu_custom_call.1} parent=39 // pred_region
          %s234 = smul.u32 20, %s16
          %p235 = scmp.lt.s32.totalorder %s234, 39
          %s236 = scalar_select %p235, %s234, 39
          %s237 = smul.addr %s236, 4
          %s238 = scalar_lea.vmem %s0, %s237
          %s239 = smul.u32 20, %s16
        $region44: #{tpu_custom_call.1} parent=39 // pred_fallthru
          _
      $region40: #{tpu_custom_call.1} parent=5 // pred_fallthru
        _
      %p240 = scmp.le.s32.totalorder 1, %s16
      %p241 = scmp.lt.s32.totalorder %s16, 3
      %p242 = pnand %p240, %p241
      %p243 = pneg %p242
      // Predicated region
      $region45: #{tpu_custom_call.1} parent=5 // pred_check
        _
      $region46: #{tpu_custom_call.1} parent=5 // pred_check_branch
        %245 = sbr.rel (%p242) target = $region48
      $region47: #{tpu_custom_call.1} parent=5 // pred_region
        %s246 = ssub.s32 %s16, 1
        %s247 = smul.u32 20, %s21
        %p248 = scmp.lt.s32.totalorder %s247, 39
        %s249 = scalar_select %p248, %s247, 39
        %s250 = smul.addr %s249, 4
        %s251 = scalar_lea.vmem %s0, %s250
        %p252 = pneg %p42
        %p253 = pneg %p39
        %p254 = pneg %p63
        %p255 = pneg %p60
        %p256 = pneg %p84
        %p257 = pneg %p81
        %p258 = pneg %p105
        %p259 = pneg %p102
        %p260 = pneg %p126
        %p261 = pneg %p123
        %p262 = pneg %p147
        %p263 = pneg %p144
        %p264 = pneg %p168
        %p265 = pneg %p165
        %p266 = pneg %p194
        %p267 = pneg %p191
        %s268 = sand.u32 %s181, 1
        %s269 = scalar_lea.sflag [#allocation3], %s268
        %s270 = sand.u32 %s181, 1
        %s271 = smul.addr %s270, 160
        %s272 = scalar_lea.vmem [#allocation2], %s271
        %s273 = smul.u32 20, %s21
        %p274 = scmp.lt.s32.totalorder %s273, 39
        %s275 = scalar_select %p274, %s273, 39
        %s276 = smul.addr %s275, 4
        %s277 = scalar_lea.vmem %s0, %s276
        %s278 = smul.u32 20, %s21
        %s279 = smul.u32 20, %s21
        %v281 = vld [vmem:[%s277] sm:$0xf]
        %v282 = vld [vmem:[%s277 + $0x4] sm:$0xf]
        %v283 = vld [vmem:[%s277 + $0x8] sm:$0xf]
        %v284 = vld [vmem:[%s277 + $0xc] sm:$0xf]
        %v285 = vld [vmem:[%s277 + $0x10] sm:$0xf]
        %v286 = vld [vmem:[%s277 + $0x14] sm:$0xf]
        %v287 = vld [vmem:[%s277 + $0x18] sm:$0xf]
        %v288 = vld [vmem:[%s277 + $0x1c] sm:$0xf]
        %v289 = vld [vmem:[%s277 + $0x20] sm:$0xf]
        %v290 = vld [vmem:[%s277 + $0x24] sm:$0xf]
        %v291 = vld [vmem:[%s277 + $0x28] sm:$0xf]
        %v292 = vld [vmem:[%s277 + $0x2c] sm:$0xf]
        %v293 = vld [vmem:[%s277 + $0x30] sm:$0xf]
        %v294 = vld [vmem:[%s277 + $0x34] sm:$0xf]
        %v295 = vld [vmem:[%s277 + $0x38] sm:$0xf]
        %v296 = vld [vmem:[%s277 + $0x3c] sm:$0xf]
        %v297 = vld [vmem:[%s277 + $0x40] sm:$0xf]
        %v298 = vld [vmem:[%s277 + $0x44] sm:$0xf]
        %v299 = vld [vmem:[%s277 + $0x48] sm:$0xf]
        %v300 = vld [vmem:[%s277 + $0x4c] sm:$0xf]
        %v301 = vld [vmem:[%s1] sm:$0xf]
        %v302 = vld [vmem:[%s1 + $0x4] sm:$0xf]
        %v303 = vld [vmem:[%s1 + $0x8] sm:$0xf]
        %v304 = vld [vmem:[%s1 + $0xc] sm:$0xf]
        %v305 = vld [vmem:[%s2] sm:$0x1]
        %v307 = vlaneseq
        %v308 = vshrl.u32 %v307, 7
        %v309 = vsub.s32 0, %v308
        %v310 = vrot.slane %v305, %v309
        %v332 = vunpack.c.l.b16 %v281
        %v333 = vunpack.c.l.b16 %v282
        %v334 = vunpack.c.l.b16 %v283
        %v335 = vunpack.c.l.b16 %v284
        %v336 = vunpack.c.l.b16 %v285
        %v337 = vunpack.c.l.b16 %v286
        %v338 = vunpack.c.l.b16 %v287
        %v339 = vunpack.c.l.b16 %v288
        %v340 = vunpack.c.l.b16 %v289
        %v341 = vunpack.c.l.b16 %v290
        %v342 = vunpack.c.l.b16 %v291
        %v343 = vunpack.c.l.b16 %v292
        %v344 = vunpack.c.l.b16 %v293
        %v345 = vunpack.c.l.b16 %v294
        %v346 = vunpack.c.l.b16 %v295
        %v347 = vunpack.c.l.b16 %v296
        %v348 = vunpack.c.l.b16 %v297
        %v349 = vunpack.c.l.b16 %v298
        %v350 = vunpack.c.l.b16 %v299
        %v351 = vunpack.c.l.b16 %v300
        %v352 = vpack.c.b16 %v333, %v332
        %v353 = vpack.c.b16 %v335, %v334
        %v354 = vpack.c.b16 %v337, %v336
        %v355 = vpack.c.b16 %v339, %v338
        %v356 = vpack.c.b16 %v341, %v340
        %v357 = vpack.c.b16 %v343, %v342
        %v358 = vpack.c.b16 %v345, %v344
        %v359 = vpack.c.b16 %v347, %v346
        %v360 = vpack.c.b16 %v349, %v348
        %v361 = vpack.c.b16 %v351, %v350
        %v366 = vunpack.c.l.b16 %v301
        %v367 = vunpack.c.l.b16 %v302
        %v368 = vunpack.c.l.b16 %v303
        %v369 = vunpack.c.l.b16 %v304
        %v370 = vpack.c.b16 %v367, %v366
        %v371 = vpack.c.b16 %v369, %v368
        %vm374 = vcmask 261120
        %v376 = vsel %vm374, %v352, 0
        %v379 = vsel %vm374, %v353, 0
        %v382 = vsel %vm374, %v354, 0
        %v385 = vsel %vm374, %v355, 0
        %v388 = vsel %vm374, %v356, 0
        %v391 = vsel %vm374, %v357, 0
        %v394 = vsel %vm374, %v358, 0
        %v397 = vsel %vm374, %v359, 0
        %v400 = vsel %vm374, %v360, 0
        %v403 = vsel %vm374, %v361, 0
        %405 = vmatprep.subr.bf16.mxu0 0
        %406 = vmatpush1.bf16.msra.mxu0 %v370
        %407 = vmatprep.subr.bf16.mxu0 0
        %408 = vmatpush1.bf16.msra.mxu0 %v371
        %409 = vmatprep.subr.bf16.mxu0 0
        %410 = vmatpush1.bf16.msra.mxu0 0
        %411 = vmatprep.subr.bf16.mxu0 0
        %412 = vmatpush1.bf16.msra.mxu0 0
        %413 = vmatprep.subr.bf16.mxu0 0
        %414 = vmatpush1.bf16.msra.mxu0 0
        %415 = vmatprep.subr.bf16.mxu0 0
        %416 = vmatpush1.bf16.msra.mxu0 0
        %417 = vmatprep.subr.bf16.mxu0 0
        %418 = vmatpush1.bf16.msra.mxu0 0
        %419 = vmatprep.subr.bf16.mxu0 0
        %420 = vmatpush1.bf16.msra.mxu0 0
        %421 = vmatprep.subr.bf16.mxu0 0
        %422 = vmatpush1.bf16.msra.mxu0 0
        %423 = vmatprep.subr.bf16.mxu0 0
        %424 = vmatpush1.bf16.msra.mxu0 0
        %425 = vmatprep.subr.bf16.mxu0 0
        %426 = vmatpush1.bf16.msra.mxu0 0
        %427 = vmatprep.subr.bf16.mxu0 0
        %428 = vmatpush1.bf16.msra.mxu0 0
        %429 = vmatprep.subr.bf16.mxu0 0
        %430 = vmatpush1.bf16.msra.mxu0 0
        %431 = vmatprep.subr.bf16.mxu0 0
        %432 = vmatpush1.bf16.msra.mxu0 0
        %433 = vmatprep.subr.bf16.mxu0 0
        %434 = vmatpush1.bf16.msra.mxu0 0
        %435 = vmatprep.subr.bf16.mxu0 0
        %436 = vmatpush1.bf16.msra.mxu0 0
        %437 = vmatprep.mubr.bf16.mxu0 0
        %438 = vmatmul.mubr.bf16.gmra.mrb[0].mxu0 %v376
        %v439 = vpop.f32.mrb[0].mxu0
        %v440 = vadd.f32 %v310, %v439
        %v441 = vpop.f32.mrb[0].mxu0
        %v442 = vpop.f32.mrb[0].mxu0
        %v443 = vadd.f32 %v310, %v442
        %v444 = vpop.f32.mrb[0].mxu0
        %445 = vmatprep.mubr.bf16.mxu0 0
        %446 = vmatmul.mubr.bf16.gmra.mrb[0].mxu0 %v379
        %v447 = vpop.f32.mrb[0].mxu0
        %v448 = vadd.f32 %v310, %v447
        %v449 = vpop.f32.mrb[0].mxu0
        %v450 = vpop.f32.mrb[0].mxu0
        %v451 = vadd.f32 %v310, %v450
        %v452 = vpop.f32.mrb[0].mxu0
        %453 = vmatprep.mubr.bf16.mxu0 0
        %454 = vmatmul.mubr.bf16.gmra.mrb[0].mxu0 %v382
        %v455 = vpop.f32.mrb[0].mxu0
        %v456 = vadd.f32 %v310, %v455
        %v457 = vpop.f32.mrb[0].mxu0
        %v458 = vpop.f32.mrb[0].mxu0
        %v459 = vadd.f32 %v310, %v458
        %v460 = vpop.f32.mrb[0].mxu0
        %461 = vmatprep.mubr.bf16.mxu0 0
        %462 = vmatmul.mubr.bf16.gmra.mrb[0].mxu0 %v385
        %v463 = vpop.f32.mrb[0].mxu0
        %v464 = vadd.f32 %v310, %v463
        %v465 = vpop.f32.mrb[0].mxu0
        %v466 = vpop.f32.mrb[0].mxu0
        %v467 = vadd.f32 %v310, %v466
        %v468 = vpop.f32.mrb[0].mxu0
        %469 = vmatprep.mubr.bf16.mxu0 0
        %470 = vmatmul.mubr.bf16.gmra.mrb[0].mxu0 %v388
        %v471 = vpop.f32.mrb[0].mxu0
        %v472 = vadd.f32 %v310, %v471
        %v473 = vpop.f32.mrb[0].mxu0
        %v474 = vpop.f32.mrb[0].mxu0
        %v475 = vadd.f32 %v310, %v474
        %v476 = vpop.f32.mrb[0].mxu0
        %477 = vmatprep.mubr.bf16.mxu0 0
        %478 = vmatmul.mubr.bf16.gmra.mrb[0].mxu0 %v391
        %v479 = vpop.f32.mrb[0].mxu0
        %v480 = vadd.f32 %v310, %v479
        %v481 = vpop.f32.mrb[0].mxu0
        %v482 = vpop.f32.mrb[0].mxu0
        %v483 = vadd.f32 %v310, %v482
        %v484 = vpop.f32.mrb[0].mxu0
        %485 = vmatprep.mubr.bf16.mxu0 0
        %486 = vmatmul.mubr.bf16.gmra.mrb[0].mxu0 %v394
        %v487 = vpop.f32.mrb[0].mxu0
        %v488 = vadd.f32 %v310, %v487
        %v489 = vpop.f32.mrb[0].mxu0
        %v490 = vpop.f32.mrb[0].mxu0
        %v491 = vadd.f32 %v310, %v490
        %v492 = vpop.f32.mrb[0].mxu0
        %493 = vmatprep.mubr.bf16.mxu0 0
        %494 = vmatmul.mubr.bf16.gmra.mrb[0].mxu0 %v397
        %v495 = vpop.f32.mrb[0].mxu0
        %v496 = vadd.f32 %v310, %v495
        %v497 = vpop.f32.mrb[0].mxu0
        %v498 = vpop.f32.mrb[0].mxu0
        %v499 = vadd.f32 %v310, %v498
        %v500 = vpop.f32.mrb[0].mxu0
        %501 = vmatprep.mubr.bf16.mxu0 0
        %502 = vmatmul.mubr.bf16.gmra.mrb[0].mxu0 %v400
        %v503 = vpop.f32.mrb[0].mxu0
        %v504 = vadd.f32 %v310, %v503
        %v505 = vpop.f32.mrb[0].mxu0
        %v506 = vpop.f32.mrb[0].mxu0
        %v507 = vadd.f32 %v310, %v506
        %v508 = vpop.f32.mrb[0].mxu0
        %509 = vmatprep.mubr.bf16.mxu0 0
        %510 = vmatmul.mubr.bf16.gmra.mrb[0].mxu0 %v403
        %v511 = vpop.f32.mrb[0].mxu0
        %v512 = vadd.f32 %v310, %v511
        %v513 = vpop.f32.mrb[0].mxu0
        %v514 = vpop.f32.mrb[0].mxu0
        %v515 = vadd.f32 %v310, %v514
        %v516 = vpop.f32.mrb[0].mxu0
        %517 = vdwg.mxu0
        %v518 = vxor.u32 %v440, 2147483648
        %v519 = vxor.u32 %v443, 2147483648
        %v520 = vxor.u32 %v448, 2147483648
        %v521 = vxor.u32 %v451, 2147483648
        %v522 = vxor.u32 %v456, 2147483648
        %v523 = vxor.u32 %v459, 2147483648
        %v524 = vxor.u32 %v464, 2147483648
        %v525 = vxor.u32 %v467, 2147483648
        %v526 = vxor.u32 %v472, 2147483648
        %v527 = vxor.u32 %v475, 2147483648
        %v528 = vxor.u32 %v480, 2147483648
        %v529 = vxor.u32 %v483, 2147483648
        %v530 = vxor.u32 %v488, 2147483648
        %v531 = vxor.u32 %v491, 2147483648
        %v532 = vxor.u32 %v496, 2147483648
        %v533 = vxor.u32 %v499, 2147483648
        %v534 = vxor.u32 %v504, 2147483648
        %v535 = vxor.u32 %v507, 2147483648
        %v536 = vxor.u32 %v512, 2147483648
        %v537 = vxor.u32 %v515, 2147483648
        %v538 = vmul.f32 %v518, 1.442695
        %v539 = vpow.pop %v538
        %v540 = vmul.f32 %v519, 1.442695
        %v541 = vpow.pop %v540
        %v542 = vmul.f32 %v520, 1.442695
        %v543 = vpow.pop %v542
        %v544 = vmul.f32 %v521, 1.442695
        %v545 = vpow.pop %v544
        %v546 = vmul.f32 %v522, 1.442695
        %v547 = vpow.pop %v546
        %v548 = vmul.f32 %v523, 1.442695
        %v549 = vpow.pop %v548
        %v550 = vmul.f32 %v524, 1.442695
        %v551 = vpow.pop %v550
        %v552 = vmul.f32 %v525, 1.442695
        %v553 = vpow.pop %v552
        %v554 = vmul.f32 %v526, 1.442695
        %v555 = vpow.pop %v554
        %v556 = vmul.f32 %v527, 1.442695
        %v557 = vpow.pop %v556
        %v558 = vmul.f32 %v528, 1.442695
        %v559 = vpow.pop %v558
        %v560 = vmul.f32 %v529, 1.442695
        %v561 = vpow.pop %v560
        %v562 = vmul.f32 %v530, 1.442695
        %v563 = vpow.pop %v562
        %v564 = vmul.f32 %v531, 1.442695
        %v565 = vpow.pop %v564
        %v566 = vmul.f32 %v532, 1.442695
        %v567 = vpow.pop %v566
        %v568 = vmul.f32 %v533, 1.442695
        %v569 = vpow.pop %v568
        %v570 = vmul.f32 %v534, 1.442695
        %v571 = vpow.pop %v570
        %v572 = vmul.f32 %v535, 1.442695
        %v573 = vpow.pop %v572
        %v574 = vmul.f32 %v536, 1.442695
        %v575 = vpow.pop %v574
        %v576 = vmul.f32 %v537, 1.442695
        %v577 = vpow.pop %v576
        %v578 = vadd.f32 %v539, 1.0
        %v579 = vadd.f32 %v541, 1.0
        %v580 = vadd.f32 %v543, 1.0
        %v581 = vadd.f32 %v545, 1.0
        %v582 = vadd.f32 %v547, 1.0
        %v583 = vadd.f32 %v549, 1.0
        %v584 = vadd.f32 %v551, 1.0
        %v585 = vadd.f32 %v553, 1.0
        %v586 = vadd.f32 %v555, 1.0
        %v587 = vadd.f32 %v557, 1.0
        %v588 = vadd.f32 %v559, 1.0
        %v589 = vadd.f32 %v561, 1.0
        %v590 = vadd.f32 %v563, 1.0
        %v591 = vadd.f32 %v565, 1.0
        %v592 = vadd.f32 %v567, 1.0
        %v593 = vadd.f32 %v569, 1.0
        %v594 = vadd.f32 %v571, 1.0
        %v595 = vadd.f32 %v573, 1.0
        %v596 = vadd.f32 %v575, 1.0
        %v597 = vadd.f32 %v577, 1.0
        %v598 = vrcp.pop %v578
        %v599 = vmul.f32 1.0, %v598
        %v600 = vrcp.pop %v579
        %v601 = vmul.f32 1.0, %v600
        %v602 = vrcp.pop %v580
        %v603 = vmul.f32 1.0, %v602
        %v604 = vrcp.pop %v581
        %v605 = vmul.f32 1.0, %v604
        %v606 = vrcp.pop %v582
        %v607 = vmul.f32 1.0, %v606
        %v608 = vrcp.pop %v583
        %v609 = vmul.f32 1.0, %v608
        %v610 = vrcp.pop %v584
        %v611 = vmul.f32 1.0, %v610
        %v612 = vrcp.pop %v585
        %v613 = vmul.f32 1.0, %v612
        %v614 = vrcp.pop %v586
        %v615 = vmul.f32 1.0, %v614
        %v616 = vrcp.pop %v587
        %v617 = vmul.f32 1.0, %v616
        %v618 = vrcp.pop %v588
        %v619 = vmul.f32 1.0, %v618
        %v620 = vrcp.pop %v589
        %v621 = vmul.f32 1.0, %v620
        %v622 = vrcp.pop %v590
        %v623 = vmul.f32 1.0, %v622
        %v624 = vrcp.pop %v591
        %v625 = vmul.f32 1.0, %v624
        %v626 = vrcp.pop %v592
        %v627 = vmul.f32 1.0, %v626
        %v628 = vrcp.pop %v593
        %v629 = vmul.f32 1.0, %v628
        %v630 = vrcp.pop %v594
        %v631 = vmul.f32 1.0, %v630
        %v632 = vrcp.pop %v595
        %v633 = vmul.f32 1.0, %v632
        %v634 = vrcp.pop %v596
        %v635 = vmul.f32 1.0, %v634
        %v636 = vrcp.pop %v597
        %v637 = vmul.f32 1.0, %v636
        %v638 = vpack.c.bf16 %v601, %v599
        %v639 = vpack.c.bf16 %v605, %v603
        %v640 = vpack.c.bf16 %v609, %v607
        %v641 = vpack.c.bf16 %v613, %v611
        %v642 = vpack.c.bf16 %v617, %v615
        %v643 = vpack.c.bf16 %v621, %v619
        %v644 = vpack.c.bf16 %v625, %v623
        %v645 = vpack.c.bf16 %v629, %v627
        %v646 = vpack.c.bf16 %v633, %v631
        %v647 = vpack.c.bf16 %v637, %v635
        %v648 = vld [vmem:[%s3] sm:$0xf]
        %v649 = vld [vmem:[%s3 + $0x4] sm:$0xf]
        %v650 = vld [vmem:[%s3 + $0x8] sm:$0xf]
        %v651 = vld [vmem:[%s3 + $0xc] sm:$0xf]
        %v652 = vld [vmem:[%s3 + $0x10] sm:$0xf]
        %v653 = vld [vmem:[%s3 + $0x14] sm:$0xf]
        %v654 = vld [vmem:[%s3 + $0x18] sm:$0xf]
        %v655 = vld [vmem:[%s3 + $0x1c] sm:$0xf]
        %v656 = vld [vmem:[%s3 + $0x20] sm:$0xf]
        %v657 = vld [vmem:[%s3 + $0x24] sm:$0xf]
        %v658 = vld [vmem:[%s3 + $0x28] sm:$0xf]
        %v659 = vld [vmem:[%s3 + $0x2c] sm:$0xf]
        %v660 = vld [vmem:[%s3 + $0x30] sm:$0xf]
        %v661 = vld [vmem:[%s3 + $0x34] sm:$0xf]
        %v662 = vld [vmem:[%s3 + $0x38] sm:$0xf]
        %v663 = vld [vmem:[%s3 + $0x3c] sm:$0xf]
        %v664 = vld [vmem:[%s4] sm:$0x1]
        %v666 = vlaneseq
        %v667 = vshrl.u32 %v666, 7
        %v668 = vsub.s32 0, %v667
        %v669 = vrot.slane %v664, %v668
        %v687 = vunpack.c.l.b16 %v648
        %v688 = vunpack.c.l.b16 %v649
        %v689 = vunpack.c.l.b16 %v650
        %v690 = vunpack.c.l.b16 %v651
        %v691 = vunpack.c.l.b16 %v652
        %v692 = vunpack.c.l.b16 %v653
        %v693 = vunpack.c.l.b16 %v654
        %v694 = vunpack.c.l.b16 %v655
        %v695 = vunpack.c.l.b16 %v656
        %v696 = vunpack.c.l.b16 %v657
        %v697 = vunpack.c.l.b16 %v658
        %v698 = vunpack.c.l.b16 %v659
        %v699 = vunpack.c.l.b16 %v660
        %v700 = vunpack.c.l.b16 %v661
        %v701 = vunpack.c.l.b16 %v662
        %v702 = vunpack.c.l.b16 %v663
        %v703 = vpack.c.b16 %v688, %v687
        %v704 = vpack.c.b16 %v690, %v689
        %v705 = vpack.c.b16 %v692, %v691
        %v706 = vpack.c.b16 %v694, %v693
        %v707 = vpack.c.b16 %v696, %v695
        %v708 = vpack.c.b16 %v698, %v697
        %v709 = vpack.c.b16 %v700, %v699
        %v710 = vpack.c.b16 %v702, %v701
        %719 = vmatprep.subr.bf16.mxu0 0
        %720 = vmatpush1.bf16.msra.mxu0 %v703
        %721 = vmatprep.subr.bf16.mxu0 0
        %722 = vmatpush1.bf16.msra.mxu0 %v704
        %723 = vmatprep.subr.bf16.mxu0 0
        %724 = vmatpush1.bf16.msra.mxu0 %v705
        %725 = vmatprep.subr.bf16.mxu0 0
        %726 = vmatpush1.bf16.msra.mxu0 %v706
        %727 = vmatprep.subr.bf16.mxu0 0
        %728 = vmatpush1.bf16.msra.mxu0 %v707
        %729 = vmatprep.subr.bf16.mxu0 0
        %730 = vmatpush1.bf16.msra.mxu0 %v708
        %731 = vmatprep.subr.bf16.mxu0 0
        %732 = vmatpush1.bf16.msra.mxu0 %v709
        %733 = vmatprep.subr.bf16.mxu0 0
        %734 = vmatpush1.bf16.msra.mxu0 %v710
        %735 = vmatprep.subr.bf16.mxu0 0
        %736 = vmatpush1.bf16.msra.mxu0 0
        %737 = vmatprep.subr.bf16.mxu0 0
        %738 = vmatpush1.bf16.msra.mxu0 0
        %739 = vmatprep.subr.bf16.mxu0 0
        %740 = vmatpush1.bf16.msra.mxu0 0
        %741 = vmatprep.subr.bf16.mxu0 0
        %742 = vmatpush1.bf16.msra.mxu0 0
        %743 = vmatprep.subr.bf16.mxu0 0
        %744 = vmatpush1.bf16.msra.mxu0 0
        %745 = vmatprep.subr.bf16.mxu0 0
        %746 = vmatpush1.bf16.msra.mxu0 0
        %747 = vmatprep.subr.bf16.mxu0 0
        %748 = vmatpush1.bf16.msra.mxu0 0
        %749 = vmatprep.subr.bf16.mxu0 0
        %750 = vmatpush1.bf16.msra.mxu0 0
        %751 = vmatprep.mubr.bf16.mxu0 0
        %752 = vmatmul.mubr.bf16.gmra.mrb[0].mxu0 %v638
        %v753 = vpop.f32.mrb[0].mxu0
        %v754 = vadd.f32 %v669, %v753
        %v755 = vpop.f32.mrb[0].mxu0
        %v756 = vpop.f32.mrb[0].mxu0
        %v757 = vadd.f32 %v669, %v756
        %v758 = vpop.f32.mrb[0].mxu0
        %759 = vmatprep.mubr.bf16.mxu0 0
        %760 = vmatmul.mubr.bf16.gmra.mrb[0].mxu0 %v639
        %v761 = vpop.f32.mrb[0].mxu0
        %v762 = vadd.f32 %v669, %v761
        %v763 = vpop.f32.mrb[0].mxu0
        %v764 = vpop.f32.mrb[0].mxu0
        %v765 = vadd.f32 %v669, %v764
        %v766 = vpop.f32.mrb[0].mxu0
        %767 = vmatprep.mubr.bf16.mxu0 0
        %768 = vmatmul.mubr.bf16.gmra.mrb[0].mxu0 %v640
        %v769 = vpop.f32.mrb[0].mxu0
        %v770 = vadd.f32 %v669, %v769
        %v771 = vpop.f32.mrb[0].mxu0
        %v772 = vpop.f32.mrb[0].mxu0
        %v773 = vadd.f32 %v669, %v772
        %v774 = vpop.f32.mrb[0].mxu0
        %775 = vmatprep.mubr.bf16.mxu0 0
        %776 = vmatmul.mubr.bf16.gmra.mrb[0].mxu0 %v641
        %v777 = vpop.f32.mrb[0].mxu0
        %v778 = vadd.f32 %v669, %v777
        %v779 = vpop.f32.mrb[0].mxu0
        %v780 = vpop.f32.mrb[0].mxu0
        %v781 = vadd.f32 %v669, %v780
        %v782 = vpop.f32.mrb[0].mxu0
        %783 = vmatprep.mubr.bf16.mxu0 0
        %784 = vmatmul.mubr.bf16.gmra.mrb[0].mxu0 %v642
        %v785 = vpop.f32.mrb[0].mxu0
        %v786 = vadd.f32 %v669, %v785
        %v787 = vpop.f32.mrb[0].mxu0
        %v788 = vpop.f32.mrb[0].mxu0
        %v789 = vadd.f32 %v669, %v788
        %v790 = vpop.f32.mrb[0].mxu0
        %791 = vmatprep.mubr.bf16.mxu0 0
        %792 = vmatmul.mubr.bf16.gmra.mrb[0].mxu0 %v643
        %v793 = vpop.f32.mrb[0].mxu0
        %v794 = vadd.f32 %v669, %v793
        %v795 = vpop.f32.mrb[0].mxu0
        %v796 = vpop.f32.mrb[0].mxu0
        %v797 = vadd.f32 %v669, %v796
        %v798 = vpop.f32.mrb[0].mxu0
        %799 = vmatprep.mubr.bf16.mxu0 0
        %800 = vmatmul.mubr.bf16.gmra.mrb[0].mxu0 %v644
        %v801 = vpop.f32.mrb[0].mxu0
        %v802 = vadd.f32 %v669, %v801
        %v803 = vpop.f32.mrb[0].mxu0
        %v804 = vpop.f32.mrb[0].mxu0
        %v805 = vadd.f32 %v669, %v804
        %v806 = vpop.f32.mrb[0].mxu0
        %807 = vmatprep.mubr.bf16.mxu0 0
        %808 = vmatmul.mubr.bf16.gmra.mrb[0].mxu0 %v645
        %v809 = vpop.f32.mrb[0].mxu0
        %v810 = vadd.f32 %v669, %v809
        %v811 = vpop.f32.mrb[0].mxu0
        %v812 = vpop.f32.mrb[0].mxu0
        %v813 = vadd.f32 %v669, %v812
        %v814 = vpop.f32.mrb[0].mxu0
        %815 = vmatprep.mubr.bf16.mxu0 0
        %816 = vmatmul.mubr.bf16.gmra.mrb[0].mxu0 %v646
        %v817 = vpop.f32.mrb[0].mxu0
        %v818 = vadd.f32 %v669, %v817
        %v819 = vpop.f32.mrb[0].mxu0
        %v820 = vpop.f32.mrb[0].mxu0
        %v821 = vadd.f32 %v669, %v820
        %v822 = vpop.f32.mrb[0].mxu0
        %823 = vmatprep.mubr.bf16.mxu0 0
        %824 = vmatmul.mubr.bf16.gmra.mrb[0].mxu0 %v647
        %v825 = vpop.f32.mrb[0].mxu0
        %v826 = vadd.f32 %v669, %v825
        %v827 = vpop.f32.mrb[0].mxu0
        %v828 = vpop.f32.mrb[0].mxu0
        %v829 = vadd.f32 %v669, %v828
        %v830 = vpop.f32.mrb[0].mxu0
        %831 = vdwg.mxu0
        %v832 = vxor.u32 %v754, 2147483648
        %v833 = vxor.u32 %v757, 2147483648
        %v834 = vxor.u32 %v762, 2147483648
        %v835 = vxor.u32 %v765, 2147483648
        %v836 = vxor.u32 %v770, 2147483648
        %v837 = vxor.u32 %v773, 2147483648
        %v838 = vxor.u32 %v778, 2147483648
        %v839 = vxor.u32 %v781, 2147483648
        %v840 = vxor.u32 %v786, 2147483648
        %v841 = vxor.u32 %v789, 2147483648
        %v842 = vxor.u32 %v794, 2147483648
        %v843 = vxor.u32 %v797, 2147483648
        %v844 = vxor.u32 %v802, 2147483648
        %v845 = vxor.u32 %v805, 2147483648
        %v846 = vxor.u32 %v810, 2147483648
        %v847 = vxor.u32 %v813, 2147483648
        %v848 = vxor.u32 %v818, 2147483648
        %v849 = vxor.u32 %v821, 2147483648
        %v850 = vxor.u32 %v826, 2147483648
        %v851 = vxor.u32 %v829, 2147483648
        %v852 = vmul.f32 %v832, 1.442695
        %v853 = vpow.pop %v852
        %v854 = vmul.f32 %v833, 1.442695
        %v855 = vpow.pop %v854
        %v856 = vmul.f32 %v834, 1.442695
        %v857 = vpow.pop %v856
        %v858 = vmul.f32 %v835, 1.442695
        %v859 = vpow.pop %v858
        %v860 = vmul.f32 %v836, 1.442695
        %v861 = vpow.pop %v860
        %v862 = vmul.f32 %v837, 1.442695
        %v863 = vpow.pop %v862
        %v864 = vmul.f32 %v838, 1.442695
        %v865 = vpow.pop %v864
        %v866 = vmul.f32 %v839, 1.442695
        %v867 = vpow.pop %v866
        %v868 = vmul.f32 %v840, 1.442695
        %v869 = vpow.pop %v868
        %v870 = vmul.f32 %v841, 1.442695
        %v871 = vpow.pop %v870
        %v872 = vmul.f32 %v842, 1.442695
        %v873 = vpow.pop %v872
        %v874 = vmul.f32 %v843, 1.442695
        %v875 = vpow.pop %v874
        %v876 = vmul.f32 %v844, 1.442695
        %v877 = vpow.pop %v876
        %v878 = vmul.f32 %v845, 1.442695
        %v879 = vpow.pop %v878
        %v880 = vmul.f32 %v846, 1.442695
        %v881 = vpow.pop %v880
        %v882 = vmul.f32 %v847, 1.442695
        %v883 = vpow.pop %v882
        %v884 = vmul.f32 %v848, 1.442695
        %v885 = vpow.pop %v884
        %v886 = vmul.f32 %v849, 1.442695
        %v887 = vpow.pop %v886
        %v888 = vmul.f32 %v850, 1.442695
        %v889 = vpow.pop %v888
        %v890 = vmul.f32 %v851, 1.442695
        %v891 = vpow.pop %v890
        %v892 = vadd.f32 %v853, 1.0
        %v893 = vadd.f32 %v855, 1.0
        %v894 = vadd.f32 %v857, 1.0
        %v895 = vadd.f32 %v859, 1.0
        %v896 = vadd.f32 %v861, 1.0
        %v897 = vadd.f32 %v863, 1.0
        %v898 = vadd.f32 %v865, 1.0
        %v899 = vadd.f32 %v867, 1.0
        %v900 = vadd.f32 %v869, 1.0
        %v901 = vadd.f32 %v871, 1.0
        %v902 = vadd.f32 %v873, 1.0
        %v903 = vadd.f32 %v875, 1.0
        %v904 = vadd.f32 %v877, 1.0
        %v905 = vadd.f32 %v879, 1.0
        %v906 = vadd.f32 %v881, 1.0
        %v907 = vadd.f32 %v883, 1.0
        %v908 = vadd.f32 %v885, 1.0
        %v909 = vadd.f32 %v887, 1.0
        %v910 = vadd.f32 %v889, 1.0
        %v911 = vadd.f32 %v891, 1.0
        %v912 = vrcp.pop %v892
        %v913 = vmul.f32 1.0, %v912
        %v914 = vrcp.pop %v893
        %v915 = vmul.f32 1.0, %v914
        %v916 = vrcp.pop %v894
        %v917 = vmul.f32 1.0, %v916
        %v918 = vrcp.pop %v895
        %v919 = vmul.f32 1.0, %v918
        %v920 = vrcp.pop %v896
        %v921 = vmul.f32 1.0, %v920
        %v922 = vrcp.pop %v897
        %v923 = vmul.f32 1.0, %v922
        %v924 = vrcp.pop %v898
        %v925 = vmul.f32 1.0, %v924
        %v926 = vrcp.pop %v899
        %v927 = vmul.f32 1.0, %v926
        %v928 = vrcp.pop %v900
        %v929 = vmul.f32 1.0, %v928
        %v930 = vrcp.pop %v901
        %v931 = vmul.f32 1.0, %v930
        %v932 = vrcp.pop %v902
        %v933 = vmul.f32 1.0, %v932
        %v934 = vrcp.pop %v903
        %v935 = vmul.f32 1.0, %v934
        %v936 = vrcp.pop %v904
        %v937 = vmul.f32 1.0, %v936
        %v938 = vrcp.pop %v905
        %v939 = vmul.f32 1.0, %v938
        %v940 = vrcp.pop %v906
        %v941 = vmul.f32 1.0, %v940
        %v942 = vrcp.pop %v907
        %v943 = vmul.f32 1.0, %v942
        %v944 = vrcp.pop %v908
        %v945 = vmul.f32 1.0, %v944
        %v946 = vrcp.pop %v909
        %v947 = vmul.f32 1.0, %v946
        %v948 = vrcp.pop %v910
        %v949 = vmul.f32 1.0, %v948
        %v950 = vrcp.pop %v911
        %v951 = vmul.f32 1.0, %v950
        %v952 = vpack.c.bf16 %v915, %v913
        %v953 = vpack.c.bf16 %v919, %v917
        %v954 = vpack.c.bf16 %v923, %v921
        %v955 = vpack.c.bf16 %v927, %v925
        %v956 = vpack.c.bf16 %v931, %v929
        %v957 = vpack.c.bf16 %v935, %v933
        %v958 = vpack.c.bf16 %v939, %v937
        %v959 = vpack.c.bf16 %v943, %v941
        %v960 = vpack.c.bf16 %v947, %v945
        %v961 = vpack.c.bf16 %v951, %v949
        %v962 = vld [vmem:[%s5] sm:$0xf]
        %v963 = vld [vmem:[%s5 + $0x4] sm:$0xf]
        %v964 = vld [vmem:[%s5 + $0x8] sm:$0xf]
        %v965 = vld [vmem:[%s5 + $0xc] sm:$0xf]
        %v966 = vld [vmem:[%s5 + $0x10] sm:$0xf]
        %v967 = vld [vmem:[%s5 + $0x14] sm:$0xf]
        %v968 = vld [vmem:[%s5 + $0x18] sm:$0xf]
        %v969 = vld [vmem:[%s5 + $0x1c] sm:$0xf]
        %v970 = vld [vmem:[%s5 + $0x20] sm:$0xf]
        %v971 = vld [vmem:[%s5 + $0x24] sm:$0xf]
        %v972 = vld [vmem:[%s5 + $0x28] sm:$0xf]
        %v973 = vld [vmem:[%s5 + $0x2c] sm:$0xf]
        %v974 = vld [vmem:[%s5 + $0x30] sm:$0xf]
        %v975 = vld [vmem:[%s5 + $0x34] sm:$0xf]
        %v976 = vld [vmem:[%s5 + $0x38] sm:$0xf]
        %v977 = vld [vmem:[%s5 + $0x3c] sm:$0xf]
        %v978 = vld [vmem:[%s6] sm:$0x1]
        %v980 = vlaneseq
        %v981 = vshrl.u32 %v980, 7
        %v982 = vsub.s32 0, %v981
        %v983 = vrot.slane %v978, %v982
        %v1001 = vunpack.c.l.b16 %v962
        %v1002 = vunpack.c.l.b16 %v963
        %v1003 = vunpack.c.l.b16 %v964
        %v1004 = vunpack.c.l.b16 %v965
        %v1005 = vunpack.c.l.b16 %v966
        %v1006 = vunpack.c.l.b16 %v967
        %v1007 = vunpack.c.l.b16 %v968
        %v1008 = vunpack.c.l.b16 %v969
        %v1009 = vunpack.c.l.b16 %v970
        %v1010 = vunpack.c.l.b16 %v971
        %v1011 = vunpack.c.l.b16 %v972
        %v1012 = vunpack.c.l.b16 %v973
        %v1013 = vunpack.c.l.b16 %v974
        %v1014 = vunpack.c.l.b16 %v975
        %v1015 = vunpack.c.l.b16 %v976
        %v1016 = vunpack.c.l.b16 %v977
        %v1017 = vpack.c.b16 %v1002, %v1001
        %v1018 = vpack.c.b16 %v1004, %v1003
        %v1019 = vpack.c.b16 %v1006, %v1005
        %v1020 = vpack.c.b16 %v1008, %v1007
        %v1021 = vpack.c.b16 %v1010, %v1009
        %v1022 = vpack.c.b16 %v1012, %v1011
        %v1023 = vpack.c.b16 %v1014, %v1013
        %v1024 = vpack.c.b16 %v1016, %v1015
        %1033 = vmatprep.subr.bf16.mxu0 0
        %1034 = vmatpush1.bf16.msra.mxu0 %v1017
        %1035 = vmatprep.subr.bf16.mxu0 0
        %1036 = vmatpush1.bf16.msra.mxu0 %v1018
        %1037 = vmatprep.subr.bf16.mxu0 0
        %1038 = vmatpush1.bf16.msra.mxu0 %v1019
        %1039 = vmatprep.subr.bf16.mxu0 0
        %1040 = vmatpush1.bf16.msra.mxu0 %v1020
        %1041 = vmatprep.subr.bf16.mxu0 0
        %1042 = vmatpush1.bf16.msra.mxu0 %v1021
        %1043 = vmatprep.subr.bf16.mxu0 0
        %1044 = vmatpush1.bf16.msra.mxu0 %v1022
        %1045 = vmatprep.subr.bf16.mxu0 0
        %1046 = vmatpush1.bf16.msra.mxu0 %v1023
        %1047 = vmatprep.subr.bf16.mxu0 0
        %1048 = vmatpush1.bf16.msra.mxu0 %v1024
        %1049 = vmatprep.subr.bf16.mxu0 0
        %1050 = vmatpush1.bf16.msra.mxu0 0
        %1051 = vmatprep.subr.bf16.mxu0 0
        %1052 = vmatpush1.bf16.msra.mxu0 0
        %1053 = vmatprep.subr.bf16.mxu0 0
        %1054 = vmatpush1.bf16.msra.mxu0 0
        %1055 = vmatprep.subr.bf16.mxu0 0
        %1056 = vmatpush1.bf16.msra.mxu0 0
        %1057 = vmatprep.subr.bf16.mxu0 0
        %1058 = vmatpush1.bf16.msra.mxu0 0
        %1059 = vmatprep.subr.bf16.mxu0 0
        %1060 = vmatpush1.bf16.msra.mxu0 0
        %1061 = vmatprep.subr.bf16.mxu0 0
        %1062 = vmatpush1.bf16.msra.mxu0 0
        %1063 = vmatprep.subr.bf16.mxu0 0
        %1064 = vmatpush1.bf16.msra.mxu0 0
        %1065 = vmatprep.mubr.bf16.mxu0 0
        %1066 = vmatmul.mubr.bf16.gmra.mrb[0].mxu0 %v952
        %v1067 = vpop.f32.mrb[0].mxu0
        %v1068 = vadd.f32 %v983, %v1067
        %v1069 = vpop.f32.mrb[0].mxu0
        %v1070 = vpop.f32.mrb[0].mxu0
        %v1071 = vadd.f32 %v983, %v1070
        %v1072 = vpop.f32.mrb[0].mxu0
        %1073 = vmatprep.mubr.bf16.mxu0 0
        %1074 = vmatmul.mubr.bf16.gmra.mrb[0].mxu0 %v953
        %v1075 = vpop.f32.mrb[0].mxu0
        %v1076 = vadd.f32 %v983, %v1075
        %v1077 = vpop.f32.mrb[0].mxu0
        %v1078 = vpop.f32.mrb[0].mxu0
        %v1079 = vadd.f32 %v983, %v1078
        %v1080 = vpop.f32.mrb[0].mxu0
        %1081 = vmatprep.mubr.bf16.mxu0 0
        %1082 = vmatmul.mubr.bf16.gmra.mrb[0].mxu0 %v954
        %v1083 = vpop.f32.mrb[0].mxu0
        %v1084 = vadd.f32 %v983, %v1083
        %v1085 = vpop.f32.mrb[0].mxu0
        %v1086 = vpop.f32.mrb[0].mxu0
        %v1087 = vadd.f32 %v983, %v1086
        %v1088 = vpop.f32.mrb[0].mxu0
        %1089 = vmatprep.mubr.bf16.mxu0 0
        %1090 = vmatmul.mubr.bf16.gmra.mrb[0].mxu0 %v955
        %v1091 = vpop.f32.mrb[0].mxu0
        %v1092 = vadd.f32 %v983, %v1091
        %v1093 = vpop.f32.mrb[0].mxu0
        %v1094 = vpop.f32.mrb[0].mxu0
        %v1095 = vadd.f32 %v983, %v1094
        %v1096 = vpop.f32.mrb[0].mxu0
        %1097 = vmatprep.mubr.bf16.mxu0 0
        %1098 = vmatmul.mubr.bf16.gmra.mrb[0].mxu0 %v956
        %v1099 = vpop.f32.mrb[0].mxu0
        %v1100 = vadd.f32 %v983, %v1099
        %v1101 = vpop.f32.mrb[0].mxu0
        %v1102 = vpop.f32.mrb[0].mxu0
        %v1103 = vadd.f32 %v983, %v1102
        %v1104 = vpop.f32.mrb[0].mxu0
        %1105 = vmatprep.mubr.bf16.mxu0 0
        %1106 = vmatmul.mubr.bf16.gmra.mrb[0].mxu0 %v957
        %v1107 = vpop.f32.mrb[0].mxu0
        %v1108 = vadd.f32 %v983, %v1107
        %v1109 = vpop.f32.mrb[0].mxu0
        %v1110 = vpop.f32.mrb[0].mxu0
        %v1111 = vadd.f32 %v983, %v1110
        %v1112 = vpop.f32.mrb[0].mxu0
        %1113 = vmatprep.mubr.bf16.mxu0 0
        %1114 = vmatmul.mubr.bf16.gmra.mrb[0].mxu0 %v958
        %v1115 = vpop.f32.mrb[0].mxu0
        %v1116 = vadd.f32 %v983, %v1115
        %v1117 = vpop.f32.mrb[0].mxu0
        %v1118 = vpop.f32.mrb[0].mxu0
        %v1119 = vadd.f32 %v983, %v1118
        %v1120 = vpop.f32.mrb[0].mxu0
        %1121 = vmatprep.mubr.bf16.mxu0 0
        %1122 = vmatmul.mubr.bf16.gmra.mrb[0].mxu0 %v959
        %v1123 = vpop.f32.mrb[0].mxu0
        %v1124 = vadd.f32 %v983, %v1123
        %v1125 = vpop.f32.mrb[0].mxu0
        %v1126 = vpop.f32.mrb[0].mxu0
        %v1127 = vadd.f32 %v983, %v1126
        %v1128 = vpop.f32.mrb[0].mxu0
        %1129 = vmatprep.mubr.bf16.mxu0 0
        %1130 = vmatmul.mubr.bf16.gmra.mrb[0].mxu0 %v960
        %v1131 = vpop.f32.mrb[0].mxu0
        %v1132 = vadd.f32 %v983, %v1131
        %v1133 = vpop.f32.mrb[0].mxu0
        %v1134 = vpop.f32.mrb[0].mxu0
        %v1135 = vadd.f32 %v983, %v1134
        %v1136 = vpop.f32.mrb[0].mxu0
        %1137 = vmatprep.mubr.bf16.mxu0 0
        %1138 = vmatmul.mubr.bf16.gmra.mrb[0].mxu0 %v961
        %v1139 = vpop.f32.mrb[0].mxu0
        %v1140 = vadd.f32 %v983, %v1139
        %v1141 = vpop.f32.mrb[0].mxu0
        %v1142 = vpop.f32.mrb[0].mxu0
        %v1143 = vadd.f32 %v983, %v1142
        %v1144 = vpop.f32.mrb[0].mxu0
        %1145 = vdwg.mxu0
        %1146 = vst [vmem:[%s272] sm:$0xff] %v1068
        %1147 = vst [vmem:[%s272 + $0x8] sm:$0xff] %v1071
        %1148 = vst [vmem:[%s272 + $0x10] sm:$0xff] %v1076
        %1149 = vst [vmem:[%s272 + $0x18] sm:$0xff] %v1079
        %1150 = vst [vmem:[%s272 + $0x20] sm:$0xff] %v1084
        %1151 = vst [vmem:[%s272 + $0x28] sm:$0xff] %v1087
        %1152 = vst [vmem:[%s272 + $0x30] sm:$0xff] %v1092
        %1153 = vst [vmem:[%s272 + $0x38] sm:$0xff] %v1095
        %1154 = vst [vmem:[%s272 + $0x40] sm:$0xff] %v1100
        %1155 = vst [vmem:[%s272 + $0x48] sm:$0xff] %v1103
        %1156 = vst [vmem:[%s272 + $0x50] sm:$0xff] %v1108
        %1157 = vst [vmem:[%s272 + $0x58] sm:$0xff] %v1111
        %1158 = vst [vmem:[%s272 + $0x60] sm:$0xff] %v1116
        %1159 = vst [vmem:[%s272 + $0x68] sm:$0xff] %v1119
        %1160 = vst [vmem:[%s272 + $0x70] sm:$0xff] %v1124
        %1161 = vst [vmem:[%s272 + $0x78] sm:$0xff] %v1127
        %1162 = vst [vmem:[%s272 + $0x80] sm:$0xff] %v1132
        %1163 = vst [vmem:[%s272 + $0x88] sm:$0xff] %v1135
        %1164 = vst [vmem:[%s272 + $0x90] sm:$0xff] %v1140
        %1165 = vst [vmem:[%s272 + $0x98] sm:$0xff] %v1143
        %s1166 = sand.u32 %s181, 1
        %s1167 = scalar_lea.sflag [#allocation3], %s1166
        %s1168 = sand.u32 %s181, 1
        %s1169 = smul.addr %s1168, 160
        %s1170 = scalar_lea.vmem [#allocation2], %s1169
        // Predicated region
        $region49: #{tpu_custom_call.1} parent=47 // pred_check
          %p1171 = pneg %p191
        $region50: #{tpu_custom_call.1} parent=47 // pred_check_branch
          %1173 = sbr.rel (%p1171) target = $region52
        $region51: #{tpu_custom_call.1} parent=47 // pred_region
          %s1174 = smul.u32 20, %s21
          %s1176 = ssub.s32 2560, 2560
          %1177 = vsyncadd %s1167, %s1176
          %s1178 = smul.addr %s1174, 128
          %s1179 = scalar_lea.hbm %s7, %s1178
          %s1180 = sshll.u32 %s1170, 4
          %s1181 = int_to_ptr.vmem [resolvable:$true] %s1180
          %1186 = dma.vmem_to_hbm [thread:$0]  %s1181, 2560, %s1179, %s1167, 128, 128, 8
        $region52: #{tpu_custom_call.1} parent=47 // pred_fallthru
          _
      $region48: #{tpu_custom_call.1} parent=5 // pred_fallthru
        _
      %p1187 = scmp.le.s32.totalorder 2, %s16
      // Predicated region
      $region53: #{tpu_custom_call.1} parent=5 // pred_check
        %p1188 = pneg %p1187
      $region54: #{tpu_custom_call.1} parent=5 // pred_check_branch
        %1190 = sbr.rel (%p1188) target = $region56
      $region55: #{tpu_custom_call.1} parent=5 // pred_region
        %s1191 = ssub.s32 %s16, 2
        // Predicated region
        $region57: #{tpu_custom_call.1} parent=55 // pred_check
          %p1192 = pneg %p197
        $region58: #{tpu_custom_call.1} parent=55 // pred_check_branch
          %1194 = sbr.rel (%p1192) target = $region60
        $region59: #{tpu_custom_call.1} parent=55 // pred_region
          %s1195 = sand.u32 %s182, 1
          %s1196 = scalar_lea.sflag [#allocation3], %s1195
          %s1197 = sand.u32 %s182, 1
          %s1198 = smul.addr %s1197, 160
          %s1199 = scalar_lea.vmem [#allocation2], %s1198
          %1200 = dma.done %s1196, 2560
        $region60: #{tpu_custom_call.1} parent=55 // pred_fallthru
          _
      $region56: #{tpu_custom_call.1} parent=5 // pred_fallthru
        _
    $region6: #{tpu_custom_call.1} parent=1 // loop_footer
      %s20 = sadd.s32 1, %s16
    $region7: #{tpu_custom_call.1} parent=1 // loop_footer_branch
      %15 = sbr.rel target = $region3
    $region8: #{tpu_custom_call.1} parent=1 // loop_exit
      _
    %1201 = vsyncpa [#allocation3], 1
    %s1202 = scalar_lea.sflag [#allocation3], 1
    %1203 = vsyncpa %s1202, 1

// kernel: tpu_custom_call.1
$region0: #{tpu_custom_call.1}
  #allocation0 [shape = 'u32[]', space=smem, size = 0x4, offset = 0x4, fixed_abs, tag = 'smem constant byte address 0x4 - core index']
  #allocation1 [shape = 'u32[144,128]{1,0:T(1,128)}', space=vmem, size = 0x12000, scoped, tag = 'internal scratch']
  %s0 = inlined_call_operand.vmem [shape: bf16[320,32], index: 0, kind: input, shape index: {}]
  %s1 = inlined_call_operand.vmem [shape: bf16[32,128], index: 1, kind: input, shape index: {}]
  %s2 = inlined_call_operand.vmem [shape: f32[1,128], index: 2, kind: input, shape index: {}]
  %s3 = inlined_call_operand.vmem [shape: bf16[128,128], index: 3, kind: input, shape index: {}]
  %s4 = inlined_call_operand.vmem [shape: f32[1,128], index: 4, kind: input, shape index: {}]
  %s5 = inlined_call_operand.vmem [shape: bf16[128,128], index: 5, kind: input, shape index: {}]
  %s6 = inlined_call_operand.vmem [shape: f32[1,128], index: 6, kind: input, shape index: {}]
  %s7 = inlined_call_operand.hbm [shape: f32[320,128], index: 7, kind: output, shape index: {}]
  %s8 = sld [smem:[#allocation0]]
  $region61: #{tpu_custom_call.1} parent=0
    _
  %s10 = ssub.s32 1, %s8
  %s11 = scalar_select 0, %s10, %s8
  $region1: #{tpu_custom_call.1} parent=0
    #allocation2 [shape = 'u8[163840]{0}', space=vmem, size = 0x28000, scoped, tag = 'output window, operand 0']
    #allocation3 [shape = 's32[2]{0}', space=sflag, size = 0x8, scoped, tag = 'scoped memory for tpu_custom_call.1']
    %12 = vsyncpa [#allocation3], 0
    %s13 = scalar_lea.sflag [#allocation3], 1
    %14 = vsyncpa %s13, 0
    loop: start=0, step=1, limit=4
    $region2: #{tpu_custom_call.1} parent=1 // loop_pre_header
      _
    $region3: #{tpu_custom_call.1} parent=1 // loop_header
      %s16 = sphi 0, %s20
      %p17 = scmp.ge.s32.totalorder %s16, 4
      %s26 = sphi 0, %s28
      %s29 = sphi 0, %s26
      %s30 = sphi 0, %s29
      %s46 = sphi 0, %s30
      %s50 = sphi 0, %s50
      %s52 = sphi 0, %s50
      %s53 = sphi 0, %s52
      %s67 = sphi 0, %s53
      %s71 = sphi 0, %s71
      %s73 = sphi 0, %s71
      %s74 = sphi 0, %s73
      %s88 = sphi 0, %s74
      %s92 = sphi 0, %s92
      %s94 = sphi 0, %s92
      %s95 = sphi 0, %s94
      %s109 = sphi 0, %s95
      %s113 = sphi 0, %s113
      %s115 = sphi 0, %s113
      %s116 = sphi 0, %s115
      %s130 = sphi 0, %s116
      %s134 = sphi 0, %s134
      %s136 = sphi 0, %s134
      %s137 = sphi 0, %s136
      %s151 = sphi 0, %s137
      %s155 = sphi 0, %s155
      %s157 = sphi 0, %s155
      %s158 = sphi 0, %s157
      %s172 = sphi 0, %s158
      %s178 = sphi 0, %s180
      %s181 = sphi 0, %s178
      %s182 = sphi 0, %s181
      %s198 = sphi 0, %s182
    $region4: #{tpu_custom_call.1} parent=1 // loop_header_branch
      %19 = sbr.rel (%p17) target = $region8
    $region5: #{tpu_custom_call.1} parent=1 // loop_body
      %s21 = ssub.s32 %s16, 1
      %s22 = ssub.s32 %s16, 2
      %s23 = sadd.s32 %s16, 1
      %s24 = ssub.s32 %s16, %s23
      %p25 = scmp.eq.s32.totalorder %s24, 0
      %s27 = sadd.s32 %s26, 1
      %s28 = scalar_select %p25, %s26, %s27
      %p31 = pneg %p25
      %p32 = scmp.eq.s32.totalorder %s16, 1
      %p33 = por %p31, %p32
      %p34 = scmp.ne.s32.totalorder %s26, %s29
      %p35 = scmp.eq.s32.totalorder %s16, 0
      %p36 = por %p34, %p35
      %p37 = scmp.ne.s32.totalorder %s26, %s29
      %p38 = scmp.eq.s32.totalorder %s21, 1
      %p39 = por %p37, %p38
      %p40 = scmp.ne.s32.totalorder %s29, %s30
      %p41 = scmp.eq.s32.totalorder %s21, 0
      %p42 = por %p40, %p41
      %p43 = scmp.ne.s32.totalorder %s29, %s30
      %p44 = scmp.eq.s32.totalorder %s22, 1
      %p45 = por %p43, %p44
      %p47 = scmp.ne.s32.totalorder %s30, %s46
      %p48 = scmp.eq.s32.totalorder %s22, 0
      %p49 = por %p47, %p48
      %s51 = sadd.s32 %s50, 1
      %p54 = scmp.eq.s32.totalorder %s16, 1
      %p55 = scmp.ne.s32.totalorder %s50, %s52
      %p56 = scmp.eq.s32.totalorder %s16, 0
      %p57 = por %p55, %p56
      %p58 = scmp.ne.s32.totalorder %s50, %s52
      %p59 = scmp.eq.s32.totalorder %s21, 1
      %p60 = por %p58, %p59
      %p61 = scmp.ne.s32.totalorder %s52, %s53
      %p62 = scmp.eq.s32.totalorder %s21, 0
      %p63 = por %p61, %p62
      %p64 = scmp.ne.s32.totalorder %s52, %s53
      %p65 = scmp.eq.s32.totalorder %s22, 1
      %p66 = por %p64, %p65
      %p68 = scmp.ne.s32.totalorder %s53, %s67
      %p69 = scmp.eq.s32.totalorder %s22, 0
      %p70 = por %p68, %p69
      %s72 = sadd.s32 %s71, 1
      %p75 = scmp.eq.s32.totalorder %s16, 1
      %p76 = scmp.ne.s32.totalorder %s71, %s73
      %p77 = scmp.eq.s32.totalorder %s16, 0
      %p78 = por %p76, %p77
      %p79 = scmp.ne.s32.totalorder %s71, %s73
      %p80 = scmp.eq.s32.totalorder %s21, 1
      %p81 = por %p79, %p80
      %p82 = scmp.ne.s32.totalorder %s73, %s74
      %p83 = scmp.eq.s32.totalorder %s21, 0
      %p84 = por %p82, %p83
      %p85 = scmp.ne.s32.totalorder %s73, %s74
      %p86 = scmp.eq.s32.totalorder %s22, 1
      %p87 = por %p85, %p86
      %p89 = scmp.ne.s32.totalorder %s74, %s88
      %p90 = scmp.eq.s32.totalorder %s22, 0
      %p91 = por %p89, %p90
      %s93 = sadd.s32 %s92, 1
      %p96 = scmp.eq.s32.totalorder %s16, 1
      %p97 = scmp.ne.s32.totalorder %s92, %s94
      %p98 = scmp.eq.s32.totalorder %s16, 0
      %p99 = por %p97, %p98
      %p100 = scmp.ne.s32.totalorder %s92, %s94
      %p101 = scmp.eq.s32.totalorder %s21, 1
      %p102 = por %p100, %p101
      %p103 = scmp.ne.s32.totalorder %s94, %s95
      %p104 = scmp.eq.s32.totalorder %s21, 0
      %p105 = por %p103, %p104
      %p106 = scmp.ne.s32.totalorder %s94, %s95
      %p107 = scmp.eq.s32.totalorder %s22, 1
      %p108 = por %p106, %p107
      %p110 = scmp.ne.s32.totalorder %s95, %s109
      %p111 = scmp.eq.s32.totalorder %s22, 0
      %p112 = por %p110, %p111
      %s114 = sadd.s32 %s113, 1
      %p117 = scmp.eq.s32.totalorder %s16, 1
      %p118 = scmp.ne.s32.totalorder %s113, %s115
      %p119 = scmp.eq.s32.totalorder %s16, 0
      %p120 = por %p118, %p119
      %p121 = scmp.ne.s32.totalorder %s113, %s115
      %p122 = scmp.eq.s32.totalorder %s21, 1
      %p123 = por %p121, %p122
      %p124 = scmp.ne.s32.totalorder %s115, %s116
      %p125 = scmp.eq.s32.totalorder %s21, 0
      %p126 = por %p124, %p125
      %p127 = scmp.ne.s32.totalorder %s115, %s116
      %p128 = scmp.eq.s32.totalorder %s22, 1
      %p129 = por %p127, %p128
      %p131 = scmp.ne.s32.totalorder %s116, %s130
      %p132 = scmp.eq.s32.totalorder %s22, 0
      %p133 = por %p131, %p132
      %s135 = sadd.s32 %s134, 1
      %p138 = scmp.eq.s32.totalorder %s16, 1
      %p139 = scmp.ne.s32.totalorder %s134, %s136
      %p140 = scmp.eq.s32.totalorder %s16, 0
      %p141 = por %p139, %p140
      %p142 = scmp.ne.s32.totalorder %s134, %s136
      %p143 = scmp.eq.s32.totalorder %s21, 1
      %p144 = por %p142, %p143
      %p145 = scmp.ne.s32.totalorder %s136, %s137
      %p146 = scmp.eq.s32.totalorder %s21, 0
      %p147 = por %p145, %p146
      %p148 = scmp.ne.s32.totalorder %s136, %s137
      %p149 = scmp.eq.s32.totalorder %s22, 1
      %p150 = por %p148, %p149
      %p152 = scmp.ne.s32.totalorder %s137, %s151
      %p153 = scmp.eq.s32.totalorder %s22, 0
      %p154 = por %p152, %p153
      %s156 = sadd.s32 %s155, 1
      %p159 = scmp.eq.s32.totalorder %s16, 1
      %p160 = scmp.ne.s32.totalorder %s155, %s157
      %p161 = scmp.eq.s32.totalorder %s16, 0
      %p162 = por %p160, %p161
      %p163 = scmp.ne.s32.totalorder %s155, %s157
      %p164 = scmp.eq.s32.totalorder %s21, 1
      %p165 = por %p163, %p164
      %p166 = scmp.ne.s32.totalorder %s157, %s158
      %p167 = scmp.eq.s32.totalorder %s21, 0
      %p168 = por %p166, %p167
      %p169 = scmp.ne.s32.totalorder %s157, %s158
      %p170 = scmp.eq.s32.totalorder %s22, 1
      %p171 = por %p169, %p170
      %p173 = scmp.ne.s32.totalorder %s158, %s172
      %p174 = scmp.eq.s32.totalorder %s22, 0
      %p175 = por %p173, %p174
      %s176 = ssub.s32 %s16, %s23
      %p177 = scmp.eq.s32.totalorder %s176, 0
      %s179 = sadd.s32 %s178, 1
      %s180 = scalar_select %p177, %s178, %s179
      %p183 = pneg %p177
      %p184 = scmp.eq.s32.totalorder %s16, 1
      %p185 = por %p183, %p184
      %p186 = scmp.ne.s32.totalorder %s178, %s181
      %p187 = scmp.eq.s32.totalorder %s16, 0
      %p188 = por %p186, %p187
      %p189 = scmp.ne.s32.totalorder %s178, %s181
      %p190 = scmp.eq.s32.totalorder %s21, 1
      %p191 = por %p189, %p190
      %p192 = scmp.ne.s32.totalorder %s181, %s182
      %p193 = scmp.eq.s32.totalorder %s21, 0
      %p194 = por %p192, %p193
      %p195 = scmp.ne.s32.totalorder %s181, %s182
      %p196 = scmp.eq.s32.totalorder %s22, 1
      %p197 = por %p195, %p196
      %p199 = scmp.ne.s32.totalorder %s182, %s198
      %p200 = scmp.eq.s32.totalorder %s22, 0
      %p201 = por %p199, %p200
      %p202 = scmp.le.s32.totalorder 1, %s16
      %p203 = scmp.lt.s32.totalorder %s16, 3
      %p204 = pnand %p202, %p203
      %p205 = pneg %p204
      // Predicated region
      $region9: #{tpu_custom_call.1} parent=5 // pred_check
        _
      $region10: #{tpu_custom_call.1} parent=5 // pred_check_branch
        %207 = sbr.rel (%p204) target = $region12
      $region11: #{tpu_custom_call.1} parent=5 // pred_region
        %s208 = ssub.s32 %s16, 1
        // Predicated region
        $region13: #{tpu_custom_call.1} parent=11 // pred_check
          %p209 = pneg %p63
        $region14: #{tpu_custom_call.1} parent=11 // pred_check_branch
          %211 = sbr.rel (%p209) target = $region16
        $region15: #{tpu_custom_call.1} parent=11 // pred_region
          _
        $region16: #{tpu_custom_call.1} parent=11 // pred_fallthru
          _
        // Predicated region
        $region17: #{tpu_custom_call.1} parent=11 // pred_check
          %p212 = pneg %p84
        $region18: #{tpu_custom_call.1} parent=11 // pred_check_branch
          %214 = sbr.rel (%p212) target = $region20
        $region19: #{tpu_custom_call.1} parent=11 // pred_region
          _
        $region20: #{tpu_custom_call.1} parent=11 // pred_fallthru
          _
        // Predicated region
        $region21: #{tpu_custom_call.1} parent=11 // pred_check
          %p215 = pneg %p105
        $region22: #{tpu_custom_call.1} parent=11 // pred_check_branch
          %217 = sbr.rel (%p215) target = $region24
        $region23: #{tpu_custom_call.1} parent=11 // pred_region
          _
        $region24: #{tpu_custom_call.1} parent=11 // pred_fallthru
          _
        // Predicated region
        $region25: #{tpu_custom_call.1} parent=11 // pred_check
          %p218 = pneg %p126
        $region26: #{tpu_custom_call.1} parent=11 // pred_check_branch
          %220 = sbr.rel (%p218) target = $region28
        $region27: #{tpu_custom_call.1} parent=11 // pred_region
          _
        $region28: #{tpu_custom_call.1} parent=11 // pred_fallthru
          _
        // Predicated region
        $region29: #{tpu_custom_call.1} parent=11 // pred_check
          %p221 = pneg %p147
        $region30: #{tpu_custom_call.1} parent=11 // pred_check_branch
          %223 = sbr.rel (%p221) target = $region32
        $region31: #{tpu_custom_call.1} parent=11 // pred_region
          _
        $region32: #{tpu_custom_call.1} parent=11 // pred_fallthru
          _
        // Predicated region
        $region33: #{tpu_custom_call.1} parent=11 // pred_check
          %p224 = pneg %p168
        $region34: #{tpu_custom_call.1} parent=11 // pred_check_branch
          %226 = sbr.rel (%p224) target = $region36
        $region35: #{tpu_custom_call.1} parent=11 // pred_region
          _
        $region36: #{tpu_custom_call.1} parent=11 // pred_fallthru
          _
      $region12: #{tpu_custom_call.1} parent=5 // pred_fallthru
        _
      %p227 = scmp.lt.s32.totalorder %s16, 2
      // Predicated region
      $region37: #{tpu_custom_call.1} parent=5 // pred_check
        %p228 = pneg %p227
      $region38: #{tpu_custom_call.1} parent=5 // pred_check_branch
        %230 = sbr.rel (%p228) target = $region40
      $region39: #{tpu_custom_call.1} parent=5 // pred_region
        // Predicated region
        $region41: #{tpu_custom_call.1} parent=39 // pred_check
          %p231 = pneg %p36
        $region42: #{tpu_custom_call.1} parent=39 // pred_check_branch
          %233 = sbr.rel (%p231) target = $region44
        $region43: #{tpu_custom_call.1} parent=39 // pred_region
          %s234 = smul.u32 20, %s16
          %p235 = scmp.lt.s32.totalorder %s234, 39
          %s236 = scalar_select %p235, %s234, 39
          %s237 = smul.addr %s236, 4
          %s238 = scalar_lea.vmem %s0, %s237
          %s239 = smul.u32 20, %s16
        $region44: #{tpu_custom_call.1} parent=39 // pred_fallthru
          _
      $region40: #{tpu_custom_call.1} parent=5 // pred_fallthru
        _
      %p240 = scmp.le.s32.totalorder 1, %s16
      %p241 = scmp.lt.s32.totalorder %s16, 3
      %p242 = pnand %p240, %p241
      %p243 = pneg %p242
      // Predicated region
      $region45: #{tpu_custom_call.1} parent=5 // pred_check
        _
      $region46: #{tpu_custom_call.1} parent=5 // pred_check_branch
        %245 = sbr.rel (%p242) target = $region48
      $region47: #{tpu_custom_call.1} parent=5 // pred_region
        %s246 = ssub.s32 %s16, 1
        %s247 = smul.u32 20, %s21
        %p248 = scmp.lt.s32.totalorder %s247, 39
        %s249 = scalar_select %p248, %s247, 39
        %s250 = smul.addr %s249, 4
        %s251 = scalar_lea.vmem %s0, %s250
        %p252 = pneg %p42
        %p253 = pneg %p39
        %p254 = pneg %p63
        %p255 = pneg %p60
        %p256 = pneg %p84
        %p257 = pneg %p81
        %p258 = pneg %p105
        %p259 = pneg %p102
        %p260 = pneg %p126
        %p261 = pneg %p123
        %p262 = pneg %p147
        %p263 = pneg %p144
        %p264 = pneg %p168
        %p265 = pneg %p165
        %p266 = pneg %p194
        %p267 = pneg %p191
        %s268 = sand.u32 %s181, 1
        %s269 = scalar_lea.sflag [#allocation3], %s268
        %s270 = sand.u32 %s181, 1
        %s271 = smul.addr %s270, 160
        %s272 = scalar_lea.vmem [#allocation2], %s271
        %s273 = smul.u32 20, %s21
        %p274 = scmp.lt.s32.totalorder %s273, 39
        %s275 = scalar_select %p274, %s273, 39
        %s276 = smul.addr %s275, 4
        %s277 = scalar_lea.vmem %s0, %s276
        %s278 = smul.u32 20, %s21
        %s279 = smul.u32 20, %s21
        %v281 = vld [vmem:[%s277] sm:$0xf]
        %v282 = vld [vmem:[%s277 + $0x4] sm:$0xf]
        %v283 = vld [vmem:[%s277 + $0x8] sm:$0xf]
        %v284 = vld [vmem:[%s277 + $0xc] sm:$0xf]
        %v285 = vld [vmem:[%s277 + $0x10] sm:$0xf]
        %v286 = vld [vmem:[%s277 + $0x14] sm:$0xf]
        %v287 = vld [vmem:[%s277 + $0x18] sm:$0xf]
        %v288 = vld [vmem:[%s277 + $0x1c] sm:$0xf]
        %v289 = vld [vmem:[%s277 + $0x20] sm:$0xf]
        %v290 = vld [vmem:[%s277 + $0x24] sm:$0xf]
        %v291 = vld [vmem:[%s277 + $0x28] sm:$0xf]
        %v292 = vld [vmem:[%s277 + $0x2c] sm:$0xf]
        %v293 = vld [vmem:[%s277 + $0x30] sm:$0xf]
        %v294 = vld [vmem:[%s277 + $0x34] sm:$0xf]
        %v295 = vld [vmem:[%s277 + $0x38] sm:$0xf]
        %v296 = vld [vmem:[%s277 + $0x3c] sm:$0xf]
        %v297 = vld [vmem:[%s277 + $0x40] sm:$0xf]
        %v298 = vld [vmem:[%s277 + $0x44] sm:$0xf]
        %v299 = vld [vmem:[%s277 + $0x48] sm:$0xf]
        %v300 = vld [vmem:[%s277 + $0x4c] sm:$0xf]
        %v301 = vld [vmem:[%s1] sm:$0xf]
        %v302 = vld [vmem:[%s1 + $0x4] sm:$0xf]
        %v303 = vld [vmem:[%s1 + $0x8] sm:$0xf]
        %v304 = vld [vmem:[%s1 + $0xc] sm:$0xf]
        %v305 = vld [vmem:[%s2] sm:$0x1]
        %v307 = vlaneseq
        %v308 = vshrl.u32 %v307, 7
        %v309 = vsub.s32 0, %v308
        %v310 = vrot.slane %v305, %v309
        %v332 = vunpack.c.l.b16 %v281
        %v333 = vunpack.c.l.b16 %v282
        %v334 = vunpack.c.l.b16 %v283
        %v335 = vunpack.c.l.b16 %v284
        %v336 = vunpack.c.l.b16 %v285
        %v337 = vunpack.c.l.b16 %v286
        %v338 = vunpack.c.l.b16 %v287
        %v339 = vunpack.c.l.b16 %v288
        %v340 = vunpack.c.l.b16 %v289
        %v341 = vunpack.c.l.b16 %v290
        %v342 = vunpack.c.l.b16 %v291
        %v343 = vunpack.c.l.b16 %v292
        %v344 = vunpack.c.l.b16 %v293
        %v345 = vunpack.c.l.b16 %v294
        %v346 = vunpack.c.l.b16 %v295
        %v347 = vunpack.c.l.b16 %v296
        %v348 = vunpack.c.l.b16 %v297
        %v349 = vunpack.c.l.b16 %v298
        %v350 = vunpack.c.l.b16 %v299
        %v351 = vunpack.c.l.b16 %v300
        %v352 = vpack.c.b16 %v333, %v332
        %v353 = vpack.c.b16 %v335, %v334
        %v354 = vpack.c.b16 %v337, %v336
        %v355 = vpack.c.b16 %v339, %v338
        %v356 = vpack.c.b16 %v341, %v340
        %v357 = vpack.c.b16 %v343, %v342
        %v358 = vpack.c.b16 %v345, %v344
        %v359 = vpack.c.b16 %v347, %v346
        %v360 = vpack.c.b16 %v349, %v348
        %v361 = vpack.c.b16 %v351, %v350
        %v366 = vunpack.c.l.b16 %v301
        %v367 = vunpack.c.l.b16 %v302
        %v368 = vunpack.c.l.b16 %v303
        %v369 = vunpack.c.l.b16 %v304
        %v370 = vpack.c.b16 %v367, %v366
        %v371 = vpack.c.b16 %v369, %v368
        %vm374 = vcmask 261120
        %v376 = vsel %vm374, %v352, 0
        %v379 = vsel %vm374, %v353, 0
        %v382 = vsel %vm374, %v354, 0
        %v385 = vsel %vm374, %v355, 0
        %v388 = vsel %vm374, %v356, 0
        %v391 = vsel %vm374, %v357, 0
        %v394 = vsel %vm374, %v358, 0
        %v397 = vsel %vm374, %v359, 0
        %v400 = vsel %vm374, %v360, 0
        %v403 = vsel %vm374, %v361, 0
        %405 = vmatprep.subr.bf16.mxu0 0
        %406 = vmatpush1.bf16.msra.mxu0 %v370
        %407 = vmatprep.subr.bf16.mxu0 0
        %408 = vmatpush1.bf16.msra.mxu0 %v371
        %409 = vmatprep.subr.bf16.mxu0 0
        %410 = vmatpush1.bf16.msra.mxu0 0
        %411 = vmatprep.subr.bf16.mxu0 0
        %412 = vmatpush1.bf16.msra.mxu0 0
        %413 = vmatprep.subr.bf16.mxu0 0
        %414 = vmatpush1.bf16.msra.mxu0 0
        %415 = vmatprep.subr.bf16.mxu0 0
        %416 = vmatpush1.bf16.msra.mxu0 0
        %417 = vmatprep.subr.bf16.mxu0 0
        %418 = vmatpush1.bf16.msra.mxu0 0
        %419 = vmatprep.subr.bf16.mxu0 0
        %420 = vmatpush1.bf16.msra.mxu0 0
        %421 = vmatprep.subr.bf16.mxu0 0
        %422 = vmatpush1.bf16.msra.mxu0 0
        %423 = vmatprep.subr.bf16.mxu0 0
        %424 = vmatpush1.bf16.msra.mxu0 0
        %425 = vmatprep.subr.bf16.mxu0 0
        %426 = vmatpush1.bf16.msra.mxu0 0
        %427 = vmatprep.subr.bf16.mxu0 0
        %428 = vmatpush1.bf16.msra.mxu0 0
        %429 = vmatprep.subr.bf16.mxu0 0
        %430 = vmatpush1.bf16.msra.mxu0 0
        %431 = vmatprep.subr.bf16.mxu0 0
        %432 = vmatpush1.bf16.msra.mxu0 0
        %433 = vmatprep.subr.bf16.mxu0 0
        %434 = vmatpush1.bf16.msra.mxu0 0
        %435 = vmatprep.subr.bf16.mxu0 0
        %436 = vmatpush1.bf16.msra.mxu0 0
        %437 = vmatprep.mubr.bf16.mxu0 0
        %438 = vmatmul.mubr.bf16.gmra.mrb[0].mxu0 %v376
        %v439 = vpop.f32.mrb[0].mxu0
        %v440 = vadd.f32 %v310, %v439
        %v441 = vpop.f32.mrb[0].mxu0
        %v442 = vpop.f32.mrb[0].mxu0
        %v443 = vadd.f32 %v310, %v442
        %v444 = vpop.f32.mrb[0].mxu0
        %445 = vmatprep.mubr.bf16.mxu0 0
        %446 = vmatmul.mubr.bf16.gmra.mrb[0].mxu0 %v379
        %v447 = vpop.f32.mrb[0].mxu0
        %v448 = vadd.f32 %v310, %v447
        %v449 = vpop.f32.mrb[0].mxu0
        %v450 = vpop.f32.mrb[0].mxu0
        %v451 = vadd.f32 %v310, %v450
        %v452 = vpop.f32.mrb[0].mxu0
        %453 = vmatprep.mubr.bf16.mxu0 0
        %454 = vmatmul.mubr.bf16.gmra.mrb[0].mxu0 %v382
        %v455 = vpop.f32.mrb[0].mxu0
        %v456 = vadd.f32 %v310, %v455
        %v457 = vpop.f32.mrb[0].mxu0
        %v458 = vpop.f32.mrb[0].mxu0
        %v459 = vadd.f32 %v310, %v458
        %v460 = vpop.f32.mrb[0].mxu0
        %461 = vmatprep.mubr.bf16.mxu0 0
        %462 = vmatmul.mubr.bf16.gmra.mrb[0].mxu0 %v385
        %v463 = vpop.f32.mrb[0].mxu0
        %v464 = vadd.f32 %v310, %v463
        %v465 = vpop.f32.mrb[0].mxu0
        %v466 = vpop.f32.mrb[0].mxu0
        %v467 = vadd.f32 %v310, %v466
        %v468 = vpop.f32.mrb[0].mxu0
        %469 = vmatprep.mubr.bf16.mxu0 0
        %470 = vmatmul.mubr.bf16.gmra.mrb[0].mxu0 %v388
        %v471 = vpop.f32.mrb[0].mxu0
        %v472 = vadd.f32 %v310, %v471
        %v473 = vpop.f32.mrb[0].mxu0
        %v474 = vpop.f32.mrb[0].mxu0
        %v475 = vadd.f32 %v310, %v474
        %v476 = vpop.f32.mrb[0].mxu0
        %477 = vmatprep.mubr.bf16.mxu0 0
        %478 = vmatmul.mubr.bf16.gmra.mrb[0].mxu0 %v391
        %v479 = vpop.f32.mrb[0].mxu0
        %v480 = vadd.f32 %v310, %v479
        %v481 = vpop.f32.mrb[0].mxu0
        %v482 = vpop.f32.mrb[0].mxu0
        %v483 = vadd.f32 %v310, %v482
        %v484 = vpop.f32.mrb[0].mxu0
        %485 = vmatprep.mubr.bf16.mxu0 0
        %486 = vmatmul.mubr.bf16.gmra.mrb[0].mxu0 %v394
        %v487 = vpop.f32.mrb[0].mxu0
        %v488 = vadd.f32 %v310, %v487
        %v489 = vpop.f32.mrb[0].mxu0
        %v490 = vpop.f32.mrb[0].mxu0
        %v491 = vadd.f32 %v310, %v490
        %v492 = vpop.f32.mrb[0].mxu0
        %493 = vmatprep.mubr.bf16.mxu0 0
        %494 = vmatmul.mubr.bf16.gmra.mrb[0].mxu0 %v397
        %v495 = vpop.f32.mrb[0].mxu0
        %v496 = vadd.f32 %v310, %v495
        %v497 = vpop.f32.mrb[0].mxu0
        %v498 = vpop.f32.mrb[0].mxu0
        %v499 = vadd.f32 %v310, %v498
        %v500 = vpop.f32.mrb[0].mxu0
        %501 = vmatprep.mubr.bf16.mxu0 0
        %502 = vmatmul.mubr.bf16.gmra.mrb[0].mxu0 %v400
        %v503 = vpop.f32.mrb[0].mxu0
        %v504 = vadd.f32 %v310, %v503
        %v505 = vpop.f32.mrb[0].mxu0
        %v506 = vpop.f32.mrb[0].mxu0
        %v507 = vadd.f32 %v310, %v506
        %v508 = vpop.f32.mrb[0].mxu0
        %509 = vmatprep.mubr.bf16.mxu0 0
        %510 = vmatmul.mubr.bf16.gmra.mrb[0].mxu0 %v403
        %v511 = vpop.f32.mrb[0].mxu0
        %v512 = vadd.f32 %v310, %v511
        %v513 = vpop.f32.mrb[0].mxu0
        %v514 = vpop.f32.mrb[0].mxu0
        %v515 = vadd.f32 %v310, %v514
        %v516 = vpop.f32.mrb[0].mxu0
        %517 = vdwg.mxu0
        %v518 = vxor.u32 %v440, 2147483648
        %v519 = vxor.u32 %v443, 2147483648
        %v520 = vxor.u32 %v448, 2147483648
        %v521 = vxor.u32 %v451, 2147483648
        %v522 = vxor.u32 %v456, 2147483648
        %v523 = vxor.u32 %v459, 2147483648
        %v524 = vxor.u32 %v464, 2147483648
        %v525 = vxor.u32 %v467, 2147483648
        %v526 = vxor.u32 %v472, 2147483648
        %v527 = vxor.u32 %v475, 2147483648
        %v528 = vxor.u32 %v480, 2147483648
        %v529 = vxor.u32 %v483, 2147483648
        %v530 = vxor.u32 %v488, 2147483648
        %v531 = vxor.u32 %v491, 2147483648
        %v532 = vxor.u32 %v496, 2147483648
        %v533 = vxor.u32 %v499, 2147483648
        %v534 = vxor.u32 %v504, 2147483648
        %v535 = vxor.u32 %v507, 2147483648
        %v536 = vxor.u32 %v512, 2147483648
        %v537 = vxor.u32 %v515, 2147483648
        %v538 = vmul.f32 %v518, 1.442695
        %v539 = vpow.pop %v538
        %v540 = vmul.f32 %v519, 1.442695
        %v541 = vpow.pop %v540
        %v542 = vmul.f32 %v520, 1.442695
        %v543 = vpow.pop %v542
        %v544 = vmul.f32 %v521, 1.442695
        %v545 = vpow.pop %v544
        %v546 = vmul.f32 %v522, 1.442695
        %v547 = vpow.pop %v546
        %v548 = vmul.f32 %v523, 1.442695
        %v549 = vpow.pop %v548
        %v550 = vmul.f32 %v524, 1.442695
        %v551 = vpow.pop %v550
        %v552 = vmul.f32 %v525, 1.442695
        %v553 = vpow.pop %v552
        %v554 = vmul.f32 %v526, 1.442695
        %v555 = vpow.pop %v554
        %v556 = vmul.f32 %v527, 1.442695
        %v557 = vpow.pop %v556
        %v558 = vmul.f32 %v528, 1.442695
        %v559 = vpow.pop %v558
        %v560 = vmul.f32 %v529, 1.442695
        %v561 = vpow.pop %v560
        %v562 = vmul.f32 %v530, 1.442695
        %v563 = vpow.pop %v562
        %v564 = vmul.f32 %v531, 1.442695
        %v565 = vpow.pop %v564
        %v566 = vmul.f32 %v532, 1.442695
        %v567 = vpow.pop %v566
        %v568 = vmul.f32 %v533, 1.442695
        %v569 = vpow.pop %v568
        %v570 = vmul.f32 %v534, 1.442695
        %v571 = vpow.pop %v570
        %v572 = vmul.f32 %v535, 1.442695
        %v573 = vpow.pop %v572
        %v574 = vmul.f32 %v536, 1.442695
        %v575 = vpow.pop %v574
        %v576 = vmul.f32 %v537, 1.442695
        %v577 = vpow.pop %v576
        %v578 = vadd.f32 %v539, 1.0
        %v579 = vadd.f32 %v541, 1.0
        %v580 = vadd.f32 %v543, 1.0
        %v581 = vadd.f32 %v545, 1.0
        %v582 = vadd.f32 %v547, 1.0
        %v583 = vadd.f32 %v549, 1.0
        %v584 = vadd.f32 %v551, 1.0
        %v585 = vadd.f32 %v553, 1.0
        %v586 = vadd.f32 %v555, 1.0
        %v587 = vadd.f32 %v557, 1.0
        %v588 = vadd.f32 %v559, 1.0
        %v589 = vadd.f32 %v561, 1.0
        %v590 = vadd.f32 %v563, 1.0
        %v591 = vadd.f32 %v565, 1.0
        %v592 = vadd.f32 %v567, 1.0
        %v593 = vadd.f32 %v569, 1.0
        %v594 = vadd.f32 %v571, 1.0
        %v595 = vadd.f32 %v573, 1.0
        %v596 = vadd.f32 %v575, 1.0
        %v597 = vadd.f32 %v577, 1.0
        %v598 = vrcp.pop %v578
        %v599 = vmul.f32 1.0, %v598
        %v600 = vrcp.pop %v579
        %v601 = vmul.f32 1.0, %v600
        %v602 = vrcp.pop %v580
        %v603 = vmul.f32 1.0, %v602
        %v604 = vrcp.pop %v581
        %v605 = vmul.f32 1.0, %v604
        %v606 = vrcp.pop %v582
        %v607 = vmul.f32 1.0, %v606
        %v608 = vrcp.pop %v583
        %v609 = vmul.f32 1.0, %v608
        %v610 = vrcp.pop %v584
        %v611 = vmul.f32 1.0, %v610
        %v612 = vrcp.pop %v585
        %v613 = vmul.f32 1.0, %v612
        %v614 = vrcp.pop %v586
        %v615 = vmul.f32 1.0, %v614
        %v616 = vrcp.pop %v587
        %v617 = vmul.f32 1.0, %v616
        %v618 = vrcp.pop %v588
        %v619 = vmul.f32 1.0, %v618
        %v620 = vrcp.pop %v589
        %v621 = vmul.f32 1.0, %v620
        %v622 = vrcp.pop %v590
        %v623 = vmul.f32 1.0, %v622
        %v624 = vrcp.pop %v591
        %v625 = vmul.f32 1.0, %v624
        %v626 = vrcp.pop %v592
        %v627 = vmul.f32 1.0, %v626
        %v628 = vrcp.pop %v593
        %v629 = vmul.f32 1.0, %v628
        %v630 = vrcp.pop %v594
        %v631 = vmul.f32 1.0, %v630
        %v632 = vrcp.pop %v595
        %v633 = vmul.f32 1.0, %v632
        %v634 = vrcp.pop %v596
        %v635 = vmul.f32 1.0, %v634
        %v636 = vrcp.pop %v597
        %v637 = vmul.f32 1.0, %v636
        %v638 = vpack.c.bf16 %v601, %v599
        %v639 = vpack.c.bf16 %v605, %v603
        %v640 = vpack.c.bf16 %v609, %v607
        %v641 = vpack.c.bf16 %v613, %v611
        %v642 = vpack.c.bf16 %v617, %v615
        %v643 = vpack.c.bf16 %v621, %v619
        %v644 = vpack.c.bf16 %v625, %v623
        %v645 = vpack.c.bf16 %v629, %v627
        %v646 = vpack.c.bf16 %v633, %v631
        %v647 = vpack.c.bf16 %v637, %v635
        %v648 = vld [vmem:[%s3] sm:$0xf]
        %v649 = vld [vmem:[%s3 + $0x4] sm:$0xf]
        %v650 = vld [vmem:[%s3 + $0x8] sm:$0xf]
        %v651 = vld [vmem:[%s3 + $0xc] sm:$0xf]
        %v652 = vld [vmem:[%s3 + $0x10] sm:$0xf]
        %v653 = vld [vmem:[%s3 + $0x14] sm:$0xf]
        %v654 = vld [vmem:[%s3 + $0x18] sm:$0xf]
        %v655 = vld [vmem:[%s3 + $0x1c] sm:$0xf]
        %v656 = vld [vmem:[%s3 + $0x20] sm:$0xf]
        %v657 = vld [vmem:[%s3 + $0x24] sm:$0xf]
        %v658 = vld [vmem:[%s3 + $0x28] sm:$0xf]
        %v659 = vld [vmem:[%s3 + $0x2c] sm:$0xf]
        %v660 = vld [vmem:[%s3 + $0x30] sm:$0xf]
        %v661 = vld [vmem:[%s3 + $0x34] sm:$0xf]
        %v662 = vld [vmem:[%s3 + $0x38] sm:$0xf]
        %v663 = vld [vmem:[%s3 + $0x3c] sm:$0xf]
        %v664 = vld [vmem:[%s4] sm:$0x1]
        %v666 = vlaneseq
        %v667 = vshrl.u32 %v666, 7
        %v668 = vsub.s32 0, %v667
        %v669 = vrot.slane %v664, %v668
        %v687 = vunpack.c.l.b16 %v648
        %v688 = vunpack.c.l.b16 %v649
        %v689 = vunpack.c.l.b16 %v650
        %v690 = vunpack.c.l.b16 %v651
        %v691 = vunpack.c.l.b16 %v652
        %v692 = vunpack.c.l.b16 %v653
        %v693 = vunpack.c.l.b16 %v654
        %v694 = vunpack.c.l.b16 %v655
        %v695 = vunpack.c.l.b16 %v656
        %v696 = vunpack.c.l.b16 %v657
        %v697 = vunpack.c.l.b16 %v658
        %v698 = vunpack.c.l.b16 %v659
        %v699 = vunpack.c.l.b16 %v660
        %v700 = vunpack.c.l.b16 %v661
        %v701 = vunpack.c.l.b16 %v662
        %v702 = vunpack.c.l.b16 %v663
        %v703 = vpack.c.b16 %v688, %v687
        %v704 = vpack.c.b16 %v690, %v689
        %v705 = vpack.c.b16 %v692, %v691
        %v706 = vpack.c.b16 %v694, %v693
        %v707 = vpack.c.b16 %v696, %v695
        %v708 = vpack.c.b16 %v698, %v697
        %v709 = vpack.c.b16 %v700, %v699
        %v710 = vpack.c.b16 %v702, %v701
        %719 = vmatprep.subr.bf16.mxu0 0
        %720 = vmatpush1.bf16.msra.mxu0 %v703
        %721 = vmatprep.subr.bf16.mxu0 0
        %722 = vmatpush1.bf16.msra.mxu0 %v704
        %723 = vmatprep.subr.bf16.mxu0 0
        %724 = vmatpush1.bf16.msra.mxu0 %v705
        %725 = vmatprep.subr.bf16.mxu0 0
        %726 = vmatpush1.bf16.msra.mxu0 %v706
        %727 = vmatprep.subr.bf16.mxu0 0
        %728 = vmatpush1.bf16.msra.mxu0 %v707
        %729 = vmatprep.subr.bf16.mxu0 0
        %730 = vmatpush1.bf16.msra.mxu0 %v708
        %731 = vmatprep.subr.bf16.mxu0 0
        %732 = vmatpush1.bf16.msra.mxu0 %v709
        %733 = vmatprep.subr.bf16.mxu0 0
        %734 = vmatpush1.bf16.msra.mxu0 %v710
        %735 = vmatprep.subr.bf16.mxu0 0
        %736 = vmatpush1.bf16.msra.mxu0 0
        %737 = vmatprep.subr.bf16.mxu0 0
        %738 = vmatpush1.bf16.msra.mxu0 0
        %739 = vmatprep.subr.bf16.mxu0 0
        %740 = vmatpush1.bf16.msra.mxu0 0
        %741 = vmatprep.subr.bf16.mxu0 0
        %742 = vmatpush1.bf16.msra.mxu0 0
        %743 = vmatprep.subr.bf16.mxu0 0
        %744 = vmatpush1.bf16.msra.mxu0 0
        %745 = vmatprep.subr.bf16.mxu0 0
        %746 = vmatpush1.bf16.msra.mxu0 0
        %747 = vmatprep.subr.bf16.mxu0 0
        %748 = vmatpush1.bf16.msra.mxu0 0
        %749 = vmatprep.subr.bf16.mxu0 0
        %750 = vmatpush1.bf16.msra.mxu0 0
        %751 = vmatprep.mubr.bf16.mxu0 0
        %752 = vmatmul.mubr.bf16.gmra.mrb[0].mxu0 %v638
        %v753 = vpop.f32.mrb[0].mxu0
        %v754 = vadd.f32 %v669, %v753
        %v755 = vpop.f32.mrb[0].mxu0
        %v756 = vpop.f32.mrb[0].mxu0
        %v757 = vadd.f32 %v669, %v756
        %v758 = vpop.f32.mrb[0].mxu0
        %759 = vmatprep.mubr.bf16.mxu0 0
        %760 = vmatmul.mubr.bf16.gmra.mrb[0].mxu0 %v639
        %v761 = vpop.f32.mrb[0].mxu0
        %v762 = vadd.f32 %v669, %v761
        %v763 = vpop.f32.mrb[0].mxu0
        %v764 = vpop.f32.mrb[0].mxu0
        %v765 = vadd.f32 %v669, %v764
        %v766 = vpop.f32.mrb[0].mxu0
        %767 = vmatprep.mubr.bf16.mxu0 0
        %768 = vmatmul.mubr.bf16.gmra.mrb[0].mxu0 %v640
        %v769 = vpop.f32.mrb[0].mxu0
        %v770 = vadd.f32 %v669, %v769
        %v771 = vpop.f32.mrb[0].mxu0
        %v772 = vpop.f32.mrb[0].mxu0
        %v773 = vadd.f32 %v669, %v772
        %v774 = vpop.f32.mrb[0].mxu0
        %775 = vmatprep.mubr.bf16.mxu0 0
        %776 = vmatmul.mubr.bf16.gmra.mrb[0].mxu0 %v641
        %v777 = vpop.f32.mrb[0].mxu0
        %v778 = vadd.f32 %v669, %v777
        %v779 = vpop.f32.mrb[0].mxu0
        %v780 = vpop.f32.mrb[0].mxu0
        %v781 = vadd.f32 %v669, %v780
        %v782 = vpop.f32.mrb[0].mxu0
        %783 = vmatprep.mubr.bf16.mxu0 0
        %784 = vmatmul.mubr.bf16.gmra.mrb[0].mxu0 %v642
        %v785 = vpop.f32.mrb[0].mxu0
        %v786 = vadd.f32 %v669, %v785
        %v787 = vpop.f32.mrb[0].mxu0
        %v788 = vpop.f32.mrb[0].mxu0
        %v789 = vadd.f32 %v669, %v788
        %v790 = vpop.f32.mrb[0].mxu0
        %791 = vmatprep.mubr.bf16.mxu0 0
        %792 = vmatmul.mubr.bf16.gmra.mrb[0].mxu0 %v643
        %v793 = vpop.f32.mrb[0].mxu0
        %v794 = vadd.f32 %v669, %v793
        %v795 = vpop.f32.mrb[0].mxu0
        %v796 = vpop.f32.mrb[0].mxu0
        %v797 = vadd.f32 %v669, %v796
        %v798 = vpop.f32.mrb[0].mxu0
        %799 = vmatprep.mubr.bf16.mxu0 0
        %800 = vmatmul.mubr.bf16.gmra.mrb[0].mxu0 %v644
        %v801 = vpop.f32.mrb[0].mxu0
        %v802 = vadd.f32 %v669, %v801
        %v803 = vpop.f32.mrb[0].mxu0
        %v804 = vpop.f32.mrb[0].mxu0
        %v805 = vadd.f32 %v669, %v804
        %v806 = vpop.f32.mrb[0].mxu0
        %807 = vmatprep.mubr.bf16.mxu0 0
        %808 = vmatmul.mubr.bf16.gmra.mrb[0].mxu0 %v645
        %v809 = vpop.f32.mrb[0].mxu0
        %v810 = vadd.f32 %v669, %v809
        %v811 = vpop.f32.mrb[0].mxu0
        %v812 = vpop.f32.mrb[0].mxu0
        %v813 = vadd.f32 %v669, %v812
        %v814 = vpop.f32.mrb[0].mxu0
        %815 = vmatprep.mubr.bf16.mxu0 0
        %816 = vmatmul.mubr.bf16.gmra.mrb[0].mxu0 %v646
        %v817 = vpop.f32.mrb[0].mxu0
        %v818 = vadd.f32 %v669, %v817
        %v819 = vpop.f32.mrb[0].mxu0
        %v820 = vpop.f32.mrb[0].mxu0
        %v821 = vadd.f32 %v669, %v820
        %v822 = vpop.f32.mrb[0].mxu0
        %823 = vmatprep.mubr.bf16.mxu0 0
        %824 = vmatmul.mubr.bf16.gmra.mrb[0].mxu0 %v647
        %v825 = vpop.f32.mrb[0].mxu0
        %v826 = vadd.f32 %v669, %v825
        %v827 = vpop.f32.mrb[0].mxu0
        %v828 = vpop.f32.mrb[0].mxu0
        %v829 = vadd.f32 %v669, %v828
        %v830 = vpop.f32.mrb[0].mxu0
        %831 = vdwg.mxu0
        %v832 = vxor.u32 %v754, 2147483648
        %v833 = vxor.u32 %v757, 2147483648
        %v834 = vxor.u32 %v762, 2147483648
        %v835 = vxor.u32 %v765, 2147483648
        %v836 = vxor.u32 %v770, 2147483648
        %v837 = vxor.u32 %v773, 2147483648
        %v838 = vxor.u32 %v778, 2147483648
        %v839 = vxor.u32 %v781, 2147483648
        %v840 = vxor.u32 %v786, 2147483648
        %v841 = vxor.u32 %v789, 2147483648
        %v842 = vxor.u32 %v794, 2147483648
        %v843 = vxor.u32 %v797, 2147483648
        %v844 = vxor.u32 %v802, 2147483648
        %v845 = vxor.u32 %v805, 2147483648
        %v846 = vxor.u32 %v810, 2147483648
        %v847 = vxor.u32 %v813, 2147483648
        %v848 = vxor.u32 %v818, 2147483648
        %v849 = vxor.u32 %v821, 2147483648
        %v850 = vxor.u32 %v826, 2147483648
        %v851 = vxor.u32 %v829, 2147483648
        %v852 = vmul.f32 %v832, 1.442695
        %v853 = vpow.pop %v852
        %v854 = vmul.f32 %v833, 1.442695
        %v855 = vpow.pop %v854
        %v856 = vmul.f32 %v834, 1.442695
        %v857 = vpow.pop %v856
        %v858 = vmul.f32 %v835, 1.442695
        %v859 = vpow.pop %v858
        %v860 = vmul.f32 %v836, 1.442695
        %v861 = vpow.pop %v860
        %v862 = vmul.f32 %v837, 1.442695
        %v863 = vpow.pop %v862
        %v864 = vmul.f32 %v838, 1.442695
        %v865 = vpow.pop %v864
        %v866 = vmul.f32 %v839, 1.442695
        %v867 = vpow.pop %v866
        %v868 = vmul.f32 %v840, 1.442695
        %v869 = vpow.pop %v868
        %v870 = vmul.f32 %v841, 1.442695
        %v871 = vpow.pop %v870
        %v872 = vmul.f32 %v842, 1.442695
        %v873 = vpow.pop %v872
        %v874 = vmul.f32 %v843, 1.442695
        %v875 = vpow.pop %v874
        %v876 = vmul.f32 %v844, 1.442695
        %v877 = vpow.pop %v876
        %v878 = vmul.f32 %v845, 1.442695
        %v879 = vpow.pop %v878
        %v880 = vmul.f32 %v846, 1.442695
        %v881 = vpow.pop %v880
        %v882 = vmul.f32 %v847, 1.442695
        %v883 = vpow.pop %v882
        %v884 = vmul.f32 %v848, 1.442695
        %v885 = vpow.pop %v884
        %v886 = vmul.f32 %v849, 1.442695
        %v887 = vpow.pop %v886
        %v888 = vmul.f32 %v850, 1.442695
        %v889 = vpow.pop %v888
        %v890 = vmul.f32 %v851, 1.442695
        %v891 = vpow.pop %v890
        %v892 = vadd.f32 %v853, 1.0
        %v893 = vadd.f32 %v855, 1.0
        %v894 = vadd.f32 %v857, 1.0
        %v895 = vadd.f32 %v859, 1.0
        %v896 = vadd.f32 %v861, 1.0
        %v897 = vadd.f32 %v863, 1.0
        %v898 = vadd.f32 %v865, 1.0
        %v899 = vadd.f32 %v867, 1.0
        %v900 = vadd.f32 %v869, 1.0
        %v901 = vadd.f32 %v871, 1.0
        %v902 = vadd.f32 %v873, 1.0
        %v903 = vadd.f32 %v875, 1.0
        %v904 = vadd.f32 %v877, 1.0
        %v905 = vadd.f32 %v879, 1.0
        %v906 = vadd.f32 %v881, 1.0
        %v907 = vadd.f32 %v883, 1.0
        %v908 = vadd.f32 %v885, 1.0
        %v909 = vadd.f32 %v887, 1.0
        %v910 = vadd.f32 %v889, 1.0
        %v911 = vadd.f32 %v891, 1.0
        %v912 = vrcp.pop %v892
        %v913 = vmul.f32 1.0, %v912
        %v914 = vrcp.pop %v893
        %v915 = vmul.f32 1.0, %v914
        %v916 = vrcp.pop %v894
        %v917 = vmul.f32 1.0, %v916
        %v918 = vrcp.pop %v895
        %v919 = vmul.f32 1.0, %v918
        %v920 = vrcp.pop %v896
        %v921 = vmul.f32 1.0, %v920
        %v922 = vrcp.pop %v897
        %v923 = vmul.f32 1.0, %v922
        %v924 = vrcp.pop %v898
        %v925 = vmul.f32 1.0, %v924
        %v926 = vrcp.pop %v899
        %v927 = vmul.f32 1.0, %v926
        %v928 = vrcp.pop %v900
        %v929 = vmul.f32 1.0, %v928
        %v930 = vrcp.pop %v901
        %v931 = vmul.f32 1.0, %v930
        %v932 = vrcp.pop %v902
        %v933 = vmul.f32 1.0, %v932
        %v934 = vrcp.pop %v903
        %v935 = vmul.f32 1.0, %v934
        %v936 = vrcp.pop %v904
        %v937 = vmul.f32 1.0, %v936
        %v938 = vrcp.pop %v905
        %v939 = vmul.f32 1.0, %v938
        %v940 = vrcp.pop %v906
        %v941 = vmul.f32 1.0, %v940
        %v942 = vrcp.pop %v907
        %v943 = vmul.f32 1.0, %v942
        %v944 = vrcp.pop %v908
        %v945 = vmul.f32 1.0, %v944
        %v946 = vrcp.pop %v909
        %v947 = vmul.f32 1.0, %v946
        %v948 = vrcp.pop %v910
        %v949 = vmul.f32 1.0, %v948
        %v950 = vrcp.pop %v911
        %v951 = vmul.f32 1.0, %v950
        %v952 = vpack.c.bf16 %v915, %v913
        %v953 = vpack.c.bf16 %v919, %v917
        %v954 = vpack.c.bf16 %v923, %v921
        %v955 = vpack.c.bf16 %v927, %v925
        %v956 = vpack.c.bf16 %v931, %v929
        %v957 = vpack.c.bf16 %v935, %v933
        %v958 = vpack.c.bf16 %v939, %v937
        %v959 = vpack.c.bf16 %v943, %v941
        %v960 = vpack.c.bf16 %v947, %v945
        %v961 = vpack.c.bf16 %v951, %v949
        %v962 = vld [vmem:[%s5] sm:$0xf]
        %v963 = vld [vmem:[%s5 + $0x4] sm:$0xf]
        %v964 = vld [vmem:[%s5 + $0x8] sm:$0xf]
        %v965 = vld [vmem:[%s5 + $0xc] sm:$0xf]
        %v966 = vld [vmem:[%s5 + $0x10] sm:$0xf]
        %v967 = vld [vmem:[%s5 + $0x14] sm:$0xf]
        %v968 = vld [vmem:[%s5 + $0x18] sm:$0xf]
        %v969 = vld [vmem:[%s5 + $0x1c] sm:$0xf]
        %v970 = vld [vmem:[%s5 + $0x20] sm:$0xf]
        %v971 = vld [vmem:[%s5 + $0x24] sm:$0xf]
        %v972 = vld [vmem:[%s5 + $0x28] sm:$0xf]
        %v973 = vld [vmem:[%s5 + $0x2c] sm:$0xf]
        %v974 = vld [vmem:[%s5 + $0x30] sm:$0xf]
        %v975 = vld [vmem:[%s5 + $0x34] sm:$0xf]
        %v976 = vld [vmem:[%s5 + $0x38] sm:$0xf]
        %v977 = vld [vmem:[%s5 + $0x3c] sm:$0xf]
        %v978 = vld [vmem:[%s6] sm:$0x1]
        %v980 = vlaneseq
        %v981 = vshrl.u32 %v980, 7
        %v982 = vsub.s32 0, %v981
        %v983 = vrot.slane %v978, %v982
        %v1001 = vunpack.c.l.b16 %v962
        %v1002 = vunpack.c.l.b16 %v963
        %v1003 = vunpack.c.l.b16 %v964
        %v1004 = vunpack.c.l.b16 %v965
        %v1005 = vunpack.c.l.b16 %v966
        %v1006 = vunpack.c.l.b16 %v967
        %v1007 = vunpack.c.l.b16 %v968
        %v1008 = vunpack.c.l.b16 %v969
        %v1009 = vunpack.c.l.b16 %v970
        %v1010 = vunpack.c.l.b16 %v971
        %v1011 = vunpack.c.l.b16 %v972
        %v1012 = vunpack.c.l.b16 %v973
        %v1013 = vunpack.c.l.b16 %v974
        %v1014 = vunpack.c.l.b16 %v975
        %v1015 = vunpack.c.l.b16 %v976
        %v1016 = vunpack.c.l.b16 %v977
        %v1017 = vpack.c.b16 %v1002, %v1001
        %v1018 = vpack.c.b16 %v1004, %v1003
        %v1019 = vpack.c.b16 %v1006, %v1005
        %v1020 = vpack.c.b16 %v1008, %v1007
        %v1021 = vpack.c.b16 %v1010, %v1009
        %v1022 = vpack.c.b16 %v1012, %v1011
        %v1023 = vpack.c.b16 %v1014, %v1013
        %v1024 = vpack.c.b16 %v1016, %v1015
        %1033 = vmatprep.subr.bf16.mxu0 0
        %1034 = vmatpush1.bf16.msra.mxu0 %v1017
        %1035 = vmatprep.subr.bf16.mxu0 0
        %1036 = vmatpush1.bf16.msra.mxu0 %v1018
        %1037 = vmatprep.subr.bf16.mxu0 0
        %1038 = vmatpush1.bf16.msra.mxu0 %v1019
        %1039 = vmatprep.subr.bf16.mxu0 0
        %1040 = vmatpush1.bf16.msra.mxu0 %v1020
        %1041 = vmatprep.subr.bf16.mxu0 0
        %1042 = vmatpush1.bf16.msra.mxu0 %v1021
        %1043 = vmatprep.subr.bf16.mxu0 0
        %1044 = vmatpush1.bf16.msra.mxu0 %v1022
        %1045 = vmatprep.subr.bf16.mxu0 0
        %1046 = vmatpush1.bf16.msra.mxu0 %v1023
        %1047 = vmatprep.subr.bf16.mxu0 0
        %1048 = vmatpush1.bf16.msra.mxu0 %v1024
        %1049 = vmatprep.subr.bf16.mxu0 0
        %1050 = vmatpush1.bf16.msra.mxu0 0
        %1051 = vmatprep.subr.bf16.mxu0 0
        %1052 = vmatpush1.bf16.msra.mxu0 0
        %1053 = vmatprep.subr.bf16.mxu0 0
        %1054 = vmatpush1.bf16.msra.mxu0 0
        %1055 = vmatprep.subr.bf16.mxu0 0
        %1056 = vmatpush1.bf16.msra.mxu0 0
        %1057 = vmatprep.subr.bf16.mxu0 0
        %1058 = vmatpush1.bf16.msra.mxu0 0
        %1059 = vmatprep.subr.bf16.mxu0 0
        %1060 = vmatpush1.bf16.msra.mxu0 0
        %1061 = vmatprep.subr.bf16.mxu0 0
        %1062 = vmatpush1.bf16.msra.mxu0 0
        %1063 = vmatprep.subr.bf16.mxu0 0
        %1064 = vmatpush1.bf16.msra.mxu0 0
        %1065 = vmatprep.mubr.bf16.mxu0 0
        %1066 = vmatmul.mubr.bf16.gmra.mrb[0].mxu0 %v952
        %v1067 = vpop.f32.mrb[0].mxu0
        %v1068 = vadd.f32 %v983, %v1067
        %v1069 = vpop.f32.mrb[0].mxu0
        %v1070 = vpop.f32.mrb[0].mxu0
        %v1071 = vadd.f32 %v983, %v1070
        %v1072 = vpop.f32.mrb[0].mxu0
        %1073 = vmatprep.mubr.bf16.mxu0 0
        %1074 = vmatmul.mubr.bf16.gmra.mrb[0].mxu0 %v953
        %v1075 = vpop.f32.mrb[0].mxu0
        %v1076 = vadd.f32 %v983, %v1075
        %v1077 = vpop.f32.mrb[0].mxu0
        %v1078 = vpop.f32.mrb[0].mxu0
        %v1079 = vadd.f32 %v983, %v1078
        %v1080 = vpop.f32.mrb[0].mxu0
        %1081 = vmatprep.mubr.bf16.mxu0 0
        %1082 = vmatmul.mubr.bf16.gmra.mrb[0].mxu0 %v954
        %v1083 = vpop.f32.mrb[0].mxu0
        %v1084 = vadd.f32 %v983, %v1083
        %v1085 = vpop.f32.mrb[0].mxu0
        %v1086 = vpop.f32.mrb[0].mxu0
        %v1087 = vadd.f32 %v983, %v1086
        %v1088 = vpop.f32.mrb[0].mxu0
        %1089 = vmatprep.mubr.bf16.mxu0 0
        %1090 = vmatmul.mubr.bf16.gmra.mrb[0].mxu0 %v955
        %v1091 = vpop.f32.mrb[0].mxu0
        %v1092 = vadd.f32 %v983, %v1091
        %v1093 = vpop.f32.mrb[0].mxu0
        %v1094 = vpop.f32.mrb[0].mxu0
        %v1095 = vadd.f32 %v983, %v1094
        %v1096 = vpop.f32.mrb[0].mxu0
        %1097 = vmatprep.mubr.bf16.mxu0 0
        %1098 = vmatmul.mubr.bf16.gmra.mrb[0].mxu0 %v956
        %v1099 = vpop.f32.mrb[0].mxu0
        %v1100 = vadd.f32 %v983, %v1099
        %v1101 = vpop.f32.mrb[0].mxu0
        %v1102 = vpop.f32.mrb[0].mxu0
        %v1103 = vadd.f32 %v983, %v1102
        %v1104 = vpop.f32.mrb[0].mxu0
        %1105 = vmatprep.mubr.bf16.mxu0 0
        %1106 = vmatmul.mubr.bf16.gmra.mrb[0].mxu0 %v957
        %v1107 = vpop.f32.mrb[0].mxu0
        %v1108 = vadd.f32 %v983, %v1107
        %v1109 = vpop.f32.mrb[0].mxu0
        %v1110 = vpop.f32.mrb[0].mxu0
        %v1111 = vadd.f32 %v983, %v1110
        %v1112 = vpop.f32.mrb[0].mxu0
        %1113 = vmatprep.mubr.bf16.mxu0 0
        %1114 = vmatmul.mubr.bf16.gmra.mrb[0].mxu0 %v958
        %v1115 = vpop.f32.mrb[0].mxu0
        %v1116 = vadd.f32 %v983, %v1115
        %v1117 = vpop.f32.mrb[0].mxu0
        %v1118 = vpop.f32.mrb[0].mxu0
        %v1119 = vadd.f32 %v983, %v1118
        %v1120 = vpop.f32.mrb[0].mxu0
        %1121 = vmatprep.mubr.bf16.mxu0 0
        %1122 = vmatmul.mubr.bf16.gmra.mrb[0].mxu0 %v959
        %v1123 = vpop.f32.mrb[0].mxu0
        %v1124 = vadd.f32 %v983, %v1123
        %v1125 = vpop.f32.mrb[0].mxu0
        %v1126 = vpop.f32.mrb[0].mxu0
        %v1127 = vadd.f32 %v983, %v1126
        %v1128 = vpop.f32.mrb[0].mxu0
        %1129 = vmatprep.mubr.bf16.mxu0 0
        %1130 = vmatmul.mubr.bf16.gmra.mrb[0].mxu0 %v960
        %v1131 = vpop.f32.mrb[0].mxu0
        %v1132 = vadd.f32 %v983, %v1131
        %v1133 = vpop.f32.mrb[0].mxu0
        %v1134 = vpop.f32.mrb[0].mxu0
        %v1135 = vadd.f32 %v983, %v1134
        %v1136 = vpop.f32.mrb[0].mxu0
        %1137 = vmatprep.mubr.bf16.mxu0 0
        %1138 = vmatmul.mubr.bf16.gmra.mrb[0].mxu0 %v961
        %v1139 = vpop.f32.mrb[0].mxu0
        %v1140 = vadd.f32 %v983, %v1139
        %v1141 = vpop.f32.mrb[0].mxu0
        %v1142 = vpop.f32.mrb[0].mxu0
        %v1143 = vadd.f32 %v983, %v1142
        %v1144 = vpop.f32.mrb[0].mxu0
        %1145 = vdwg.mxu0
        %1146 = vst [vmem:[%s272] sm:$0xff] %v1068
        %1147 = vst [vmem:[%s272 + $0x8] sm:$0xff] %v1071
        %1148 = vst [vmem:[%s272 + $0x10] sm:$0xff] %v1076
        %1149 = vst [vmem:[%s272 + $0x18] sm:$0xff] %v1079
        %1150 = vst [vmem:[%s272 + $0x20] sm:$0xff] %v1084
        %1151 = vst [vmem:[%s272 + $0x28] sm:$0xff] %v1087
        %1152 = vst [vmem:[%s272 + $0x30] sm:$0xff] %v1092
        %1153 = vst [vmem:[%s272 + $0x38] sm:$0xff] %v1095
        %1154 = vst [vmem:[%s272 + $0x40] sm:$0xff] %v1100
        %1155 = vst [vmem:[%s272 + $0x48] sm:$0xff] %v1103
        %1156 = vst [vmem:[%s272 + $0x50] sm:$0xff] %v1108
        %1157 = vst [vmem:[%s272 + $0x58] sm:$0xff] %v1111
        %1158 = vst [vmem:[%s272 + $0x60] sm:$0xff] %v1116
        %1159 = vst [vmem:[%s272 + $0x68] sm:$0xff] %v1119
        %1160 = vst [vmem:[%s272 + $0x70] sm:$0xff] %v1124
        %1161 = vst [vmem:[%s272 + $0x78] sm:$0xff] %v1127
        %1162 = vst [vmem:[%s272 + $0x80] sm:$0xff] %v1132
        %1163 = vst [vmem:[%s272 + $0x88] sm:$0xff] %v1135
        %1164 = vst [vmem:[%s272 + $0x90] sm:$0xff] %v1140
        %1165 = vst [vmem:[%s272 + $0x98] sm:$0xff] %v1143
        %s1166 = sand.u32 %s181, 1
        %s1167 = scalar_lea.sflag [#allocation3], %s1166
        %s1168 = sand.u32 %s181, 1
        %s1169 = smul.addr %s1168, 160
        %s1170 = scalar_lea.vmem [#allocation2], %s1169
        // Predicated region
        $region49: #{tpu_custom_call.1} parent=47 // pred_check
          %p1171 = pneg %p191
        $region50: #{tpu_custom_call.1} parent=47 // pred_check_branch
          %1173 = sbr.rel (%p1171) target = $region52
        $region51: #{tpu_custom_call.1} parent=47 // pred_region
          %s1174 = smul.u32 20, %s21
          %s1176 = ssub.s32 2560, 2560
          %1177 = vsyncadd %s1167, %s1176
          %s1178 = smul.addr %s1174, 128
          %s1179 = scalar_lea.hbm %s7, %s1178
          %s1180 = sshll.u32 %s1170, 4
          %s1181 = int_to_ptr.vmem [resolvable:$true] %s1180
          %1186 = dma.vmem_to_hbm [thread:$0]  %s1181, 2560, %s1179, %s1167, 128, 128, 8
        $region52: #{tpu_custom_call.1} parent=47 // pred_fallthru
          _
      $region48: #{tpu_custom_call.1} parent=5 // pred_fallthru
        _
      %p1187 = scmp.le.s32.totalorder 2, %s16
      // Predicated region
      $region53: #{tpu_custom_call.1} parent=5 // pred_check
        %p1188 = pneg %p1187
      $region54: #{tpu_custom_call.1} parent=5 // pred_check_branch
        %1190 = sbr.rel (%p1188) target = $region56
      $region55: #{tpu_custom_call.1} parent=5 // pred_region
        %s1191 = ssub.s32 %s16, 2
        // Predicated region
        $region57: #{tpu_custom_call.1} parent=55 // pred_check
          %p1192 = pneg %p197
        $region58: #{tpu_custom_call.1} parent=55 // pred_check_branch
          %1194 = sbr.rel (%p1192) target = $region60
        $region59: #{tpu_custom_call.1} parent=55 // pred_region
          %s1195 = sand.u32 %s182, 1
          %s1196 = scalar_lea.sflag [#allocation3], %s1195
          %s1197 = sand.u32 %s182, 1
          %s1198 = smul.addr %s1197, 160
          %s1199 = scalar_lea.vmem [#allocation2], %s1198
          %1200 = dma.done %s1196, 2560
        $region60: #{tpu_custom_call.1} parent=55 // pred_fallthru
          _
      $region56: #{tpu_custom_call.1} parent=5 // pred_fallthru
        _
    $region6: #{tpu_custom_call.1} parent=1 // loop_footer
      %s20 = sadd.s32 1, %s16
    $region7: #{tpu_custom_call.1} parent=1 // loop_footer_branch
      %15 = sbr.rel target = $region3
    $region8: #{tpu_custom_call.1} parent=1 // loop_exit
      _
    %1201 = vsyncpa [#allocation3], 1
    %s1202 = scalar_lea.sflag [#allocation3], 1
    %1203 = vsyncpa %s1202, 1

</llo_original>
